<compile_context>
chip_gen: v7x
topology: tpu7x:2x2x1
jax: 0.10.0
libtpu: 0.0.40
codegen_flags: <defaults>
</compile_context>

<pallas_src>
import functools

import numpy as np
import jax
import jax.numpy as jnp
from jax import lax
from jax.experimental import pallas as pl
from jax.experimental.pallas import tpu as pltpu


# ---------------------------------------------------------------- kernels ----

def _partial_sum_kernel(x_ref, f1_ref, tw1_ref, tb1_ref, tw2_ref, tb2_ref,
                        psum_ref, *, n_valid):
    """Pass 1: per-tile partial sum over points of mix = geoNet(param) * outNet(x)."""
    tile = x_ref.shape[0]
    # outNet (trunk) on a tile of points, row layout (points on sublanes).
    t = jnp.tanh(jnp.dot(x_ref[...], tw1_ref[...],
                         preferred_element_type=jnp.float32) + tb1_ref[...])
    t = jnp.tanh(jnp.dot(t, tw2_ref[...],
                         preferred_element_type=jnp.float32) + tb2_ref[...])     # (tile, H)
    mix = f1_ref[...] * t                                   # einsum 'bh,bnh->bnh' (b == 1)

    # Mask padded rows so they do not contaminate the mean over the N real points.
    row = lax.broadcasted_iota(jnp.int32, (tile, 1), 0) + pl.program_id(0) * tile
    mix = jnp.where(row < n_valid, mix, 0.0)

    psum_ref[...] = jnp.sum(mix, axis=0, keepdims=True)[None]        # (1, 1, H)


def _out_kernel(x_ref, f1_ref, f2_ref,
                tw1_ref, tb1_ref, tw2_ref, tb2_ref,
                t2w1_ref, t2b1_ref, t2w2_ref, t2b2_ref,
                b_ref, out_ref):
    """Pass 2: recompute mix from x, run outNet2, contract with geoNet2(mix_reduced)."""
    # Recompute mix from x (cheaper than an HBM round-trip of the (N, H) mix).
    t = jnp.tanh(jnp.dot(x_ref[...], tw1_ref[...],
                         preferred_element_type=jnp.float32) + tb1_ref[...])
    t = jnp.tanh(jnp.dot(t, tw2_ref[...],
                         preferred_element_type=jnp.float32) + tb2_ref[...])     # (tile, H)
    mix = f1_ref[...] * t                                                        # (tile, H)

    # outNet2 on the tile of mix.
    t2 = jnp.tanh(jnp.dot(mix, t2w1_ref[...],
                          preferred_element_type=jnp.float32) + t2b1_ref[...])
    t2 = jnp.tanh(jnp.dot(t2, t2w2_ref[...],
                          preferred_element_type=jnp.float32) + t2b2_ref[...])   # (tile, H)

    # einsum 'bh,bnhc->bnc' (c == 1) == sum_h f2[h] * t2[n, h].
    # Single MXU contraction f2 . t2^T -> lane-dense (1, tile) result.
    val = lax.dot_general(f2_ref[...], t2, (((1,), (1,)), ((), ())),
                          preferred_element_type=jnp.float32)                    # (1, tile)
    out_ref[...] = jax.nn.sigmoid(val + b_ref[0, 0])[None]                       # (1, 1, tile)


# ---------------------------------------------------------------- wrapper ----

def geom_deeponet_forward(param, x, p, *, max_tile=512):
    N, trunk_dim = x.shape
    H = p["gW1"].shape[1]

    # Row tile: multiple of 128, capped at max_tile; pad x with zeros to a
    # whole number of tiles (padded rows are masked in pass 1 / sliced off).
    tile = min(max_tile, ((N + 127) // 128) * 128)
    n_tiles = pl.cdiv(N, tile)
    n_pad = n_tiles * tile

    x = x.astype(jnp.float32)
    if n_pad != N:
        x = jnp.pad(x, ((0, n_pad - N), (0, 0)))

    param_row = param.reshape(1, -1).astype(jnp.float32)

    # geoNet: tiny 1-row two-layer MLP; evaluate once here instead of on every
    # grid step inside the kernel.
    f1 = jnp.tanh(param_row @ p["gW1"] + p["gb1"])
    f1 = jnp.tanh(f1 @ p["gW2"] + p["gb2"])                                      # (1, H)

    def full(shp):
        return pl.BlockSpec(shp, lambda i: (0, 0))

    # ---- pass 1: per-tile partial sums of mix -------------------------------
    psums = pl.pallas_call(
        functools.partial(_partial_sum_kernel, n_valid=N),
        out_shape=jax.ShapeDtypeStruct((n_tiles, 1, H), jnp.float32),
        grid=(n_tiles,),
        in_specs=[pl.BlockSpec((tile, trunk_dim), lambda i: (i, 0)),
                  full((1, H)),
                  full(p["tW1"].shape), full(p["tb1"].shape),
                  full(p["tW2"].shape), full(p["tb2"].shape)],
        out_specs=pl.BlockSpec((1, 1, H), lambda i: (i, 0, 0)),
        compiler_params=pltpu.CompilerParams(
            dimension_semantics=("parallel",)),
    )(x, f1, p["tW1"], p["tb1"], p["tW2"], p["tb2"])

    mix_reduced = jnp.sum(psums, axis=0) / jnp.float32(N)                        # (1, H)

    # geoNet2: tiny 1-row two-layer MLP on mix_reduced, evaluated once here.
    f2 = jnp.tanh(mix_reduced @ p["g2W1"] + p["g2b1"])
    f2 = jnp.tanh(f2 @ p["g2W2"] + p["g2b2"])                                    # (1, H)

    # ---- pass 2: sigmoid( sum_h geoNet2(mix_reduced) * outNet2(mix) + b ) ----
    out_tiles = pl.pallas_call(
        _out_kernel,
        out_shape=jax.ShapeDtypeStruct((n_tiles, 1, tile), jnp.float32),
        grid=(n_tiles,),
        in_specs=[pl.BlockSpec((tile, trunk_dim), lambda i: (i, 0)),
                  full((1, H)), full((1, H)),
                  full(p["tW1"].shape), full(p["tb1"].shape),
                  full(p["tW2"].shape), full(p["tb2"].shape),
                  full(p["t2W1"].shape), full(p["t2b1"].shape),
                  full(p["t2W2"].shape), full(p["t2b2"].shape),
                  pl.BlockSpec(memory_space=pltpu.MemorySpace.SMEM)],
        out_specs=pl.BlockSpec((1, 1, tile), lambda i: (i, 0, 0)),
        compiler_params=pltpu.CompilerParams(
            dimension_semantics=("parallel",)),
    )(x, f1, f2,
      p["tW1"], p["tb1"], p["tW2"], p["tb2"],
      p["t2W1"], p["t2b1"], p["t2W2"], p["t2b2"],
      p["b"])

    # (n_tiles, 1, tile) -> (N, 1), dropping padded rows.
    return out_tiles.reshape(n_pad, 1)[:N]


# ---------------------------------------------------------- init / reference -

def init_params(key, branch_dim, trunk_dim, hidden_dim):
    """Deterministic PyTorch-style (uniform +/- 1/sqrt(fan_in)) init."""
    keys = jax.random.split(key, 8)

    def lin(k, fan_in, fan_out):
        kw, kb = jax.random.split(k)
        bound = 1.0 / np.sqrt(fan_in)
        W = jax.random.uniform(kw, (fan_in, fan_out), jnp.float32, -bound, bound)
        b = jax.random.uniform(kb, (1, fan_out), jnp.float32, -bound, bound)
        return W, b

    p = {}
    p["gW1"], p["gb1"] = lin(keys[0], branch_dim, hidden_dim)    # geoNet
    p["gW2"], p["gb2"] = lin(keys[1], hidden_dim, hidden_dim)
    p["g2W1"], p["g2b1"] = lin(keys[2], hidden_dim, hidden_dim)  # geoNet2
    p["g2W2"], p["g2b2"] = lin(keys[3], hidden_dim, hidden_dim)
    p["tW1"], p["tb1"] = lin(keys[4], trunk_dim, hidden_dim)     # outNet
    p["tW2"], p["tb2"] = lin(keys[5], hidden_dim, hidden_dim)
    p["t2W1"], p["t2b1"] = lin(keys[6], hidden_dim, hidden_dim)  # outNet2
    p["t2W2"], p["t2b2"] = lin(keys[7], hidden_dim, hidden_dim)
    p["b"] = jnp.zeros((1, 1), jnp.float32)                      # nn.Parameter(zeros(1))
    return p


def reference_forward(param, x, p):
    """Pure-JAX replica of the PyTorch forward (batch dim b == 1 folded away)."""
    f1 = jnp.tanh(param[None, :] @ p["gW1"] + p["gb1"])
    f1 = jnp.tanh(f1 @ p["gW2"] + p["gb2"])                 # (1, H)
    t1 = jnp.tanh(x @ p["tW1"] + p["tb1"])
    t1 = jnp.tanh(t1 @ p["tW2"] + p["tb2"])                 # (N, H)
    mix = f1 * t1                                           # (N, H)
    mix_reduced = jnp.mean(mix, axis=0, keepdims=True)      # mean over n
    f2 = jnp.tanh(mix_reduced @ p["g2W1"] + p["g2b1"])
    f2 = jnp.tanh(f2 @ p["g2W2"] + p["g2b2"])               # (1, H)
    t2 = jnp.tanh(mix @ p["t2W1"] + p["t2b1"])
    t2 = jnp.tanh(t2 @ p["t2W2"] + p["t2b2"])               # (N, H)
    out = jnp.sum(t2 * f2, axis=-1, keepdims=True) + p["b"][0, 0]
    return jax.nn.sigmoid(out)                              # (N, 1)


# ------------------------------------------------------------------- main ----

if __name__ == "__main__":
    branch_dim, trunk_dim, hidden_dim = 8, 3, 32   # out_dim unused by forward()
    N = 600                                        # points (exercises padding + 2 tiles)

    key = jax.random.PRNGKey(0)
    kp, kx, kw = jax.random.split(key, 3)
    param = jax.random.normal(kp, (branch_dim,), jnp.float32)   # graph.param
    x = jax.random.normal(kx, (N, trunk_dim), jnp.float32)      # graph.x

    params = init_params(kw, branch_dim, trunk_dim, hidden_dim)

    out = geom_deeponet_forward(param, x, params)
    out = jax.block_until_ready(out)

    ref = jax.block_until_ready(reference_forward(param, x, params))
    assert out.shape == (N, 1)
    np.testing.assert_allclose(np.asarray(out), np.asarray(ref), rtol=1e-4, atol=1e-5)

    print("KERNEL_OK")
</pallas_src>

<mosaic_0001>
module attributes {stable_mosaic.version = 11 : i64} {
  func.func @_partial_sum_kernel(%arg0: i32, %arg1: memref<512x3xf32, #tpu.memory_space<vmem>>, %arg2: memref<1x32xf32, #tpu.memory_space<vmem>>, %arg3: memref<3x32xf32, #tpu.memory_space<vmem>>, %arg4: memref<1x32xf32, #tpu.memory_space<vmem>>, %arg5: memref<32x32xf32, #tpu.memory_space<vmem>>, %arg6: memref<1x32xf32, #tpu.memory_space<vmem>>, %arg7: memref<1x1x32xf32, #tpu.memory_space<vmem>>) attributes {dimension_semantics = [#tpu.dimension_semantics<parallel>], iteration_bounds = array<i64: 2>, scalar_prefetch = 0 : i64, scratch_operands = 0 : i64, tpu.core_type = #tpu.core_type<tc>, window_params = [{transform_indices = @transform_0, window_bounds = array<i64: 512, 3>}, {pipeline_mode = #tpu.pipeline_mode<synchronous>, transform_indices = @transform_1, window_bounds = array<i64: 1, 32>}, {pipeline_mode = #tpu.pipeline_mode<synchronous>, transform_indices = @transform_2, window_bounds = array<i64: 3, 32>}, {pipeline_mode = #tpu.pipeline_mode<synchronous>, transform_indices = @transform_3, window_bounds = array<i64: 1, 32>}, {pipeline_mode = #tpu.pipeline_mode<synchronous>, transform_indices = @transform_4, window_bounds = array<i64: 32, 32>}, {pipeline_mode = #tpu.pipeline_mode<synchronous>, transform_indices = @transform_5, window_bounds = array<i64: 1, 32>}, {transform_indices = @transform_6, window_bounds = array<i64: 1, 1, 32>}]} {
    %c0 = arith.constant 0 : index
    %c0_0 = arith.constant 0 : index
    %0 = vector.load %arg1[%c0, %c0_0] : memref<512x3xf32, #tpu.memory_space<vmem>>, vector<512x3xf32>
    %c0_1 = arith.constant 0 : index
    %c0_2 = arith.constant 0 : index
    %1 = vector.load %arg3[%c0_1, %c0_2] : memref<3x32xf32, #tpu.memory_space<vmem>>, vector<3x32xf32>
    %cst = arith.constant dense<0.000000e+00> : vector<512x32xf32>
    %2 = tpu.matmul %0, %1, %cst {dimension_numbers = #tpu.dot_dimension_numbers<[1], [0], [0], [1], [0, 0, 1, 1], [], []>} : vector<512x3xf32>, vector<3x32xf32>, vector<512x32xf32> -> vector<512x32xf32>
    %c0_3 = arith.constant 0 : index
    %c0_4 = arith.constant 0 : index
    %3 = vector.load %arg4[%c0_3, %c0_4] : memref<1x32xf32, #tpu.memory_space<vmem>>, vector<1x32xf32>
    %4 = vector.broadcast %3 : vector<1x32xf32> to vector<512x32xf32>
    %5 = arith.addf %2, %4 : vector<512x32xf32>
    %6 = math.tanh %5 : vector<512x32xf32>
    %c0_5 = arith.constant 0 : index
    %c0_6 = arith.constant 0 : index
    %7 = vector.load %arg5[%c0_5, %c0_6] : memref<32x32xf32, #tpu.memory_space<vmem>>, vector<32x32xf32>
    %cst_7 = arith.constant dense<0.000000e+00> : vector<512x32xf32>
    %8 = tpu.matmul %6, %7, %cst_7 {dimension_numbers = #tpu.dot_dimension_numbers<[1], [0], [0], [1], [0, 0, 1, 1], [], []>} : vector<512x32xf32>, vector<32x32xf32>, vector<512x32xf32> -> vector<512x32xf32>
    %c0_8 = arith.constant 0 : index
    %c0_9 = arith.constant 0 : index
    %9 = vector.load %arg6[%c0_8, %c0_9] : memref<1x32xf32, #tpu.memory_space<vmem>>, vector<1x32xf32>
    %10 = vector.broadcast %9 : vector<1x32xf32> to vector<512x32xf32>
    %11 = arith.addf %8, %10 : vector<512x32xf32>
    %12 = math.tanh %11 : vector<512x32xf32>
    %c0_10 = arith.constant 0 : index
    %c0_11 = arith.constant 0 : index
    %13 = vector.load %arg2[%c0_10, %c0_11] : memref<1x32xf32, #tpu.memory_space<vmem>>, vector<1x32xf32>
    %14 = vector.broadcast %13 : vector<1x32xf32> to vector<512x32xf32>
    %15 = arith.mulf %14, %12 : vector<512x32xf32>
    %16 = tpu.iota {dimensions = array<i32: 0>} : vector<512x1xi32>
    %c512_i32 = arith.constant 512 : i32
    %17 = arith.muli %arg0, %c512_i32 : i32
    %18 = vector.broadcast %17 : i32 to vector<512x1xi32>
    %19 = arith.addi %16, %18 : vector<512x1xi32>
    %c600_i32 = arith.constant 600 : i32
    %20 = vector.broadcast %c600_i32 : i32 to vector<512x1xi32>
    %21 = arith.cmpi slt, %19, %20 : vector<512x1xi32>
    %cst_12 = arith.constant 0.000000e+00 : f32
    %22 = vector.shape_cast %21 : vector<512x1xi1> to vector<512x1xi1>
    %23 = vector.broadcast %22 : vector<512x1xi1> to vector<512x32xi1>
    %24 = vector.broadcast %cst_12 : f32 to vector<512x32xf32>
    %25 = arith.select %23, %15, %24 : vector<512x32xi1>, vector<512x32xf32>
    %cst_13 = arith.constant dense<0.000000e+00> : vector<32xf32>
    %26 = vector.multi_reduction <add>, %25, %cst_13 [0] : vector<512x32xf32> to vector<32xf32>
    %27 = vector.shape_cast %26 : vector<32xf32> to vector<1x32xf32>
    %28 = vector.shape_cast %27 : vector<1x32xf32> to vector<1x1x32xf32>
    %c0_14 = arith.constant 0 : index
    %c0_15 = arith.constant 0 : index
    %c0_16 = arith.constant 0 : index
    %29 = vector.load %arg7[%c0_14, %c0_15, %c0_16] : memref<1x1x32xf32, #tpu.memory_space<vmem>>, vector<1x1x32xf32>
    tpu.vector_store %arg7[%c0_14, %c0_15, %c0_16], %28 {strides = array<i32>} : memref<1x1x32xf32, #tpu.memory_space<vmem>>, vector<1x1x32xf32>,
    return
  }
  func.func @transform_0(%arg0: i32) -> (i32, i32) {
    %c0_i32 = arith.constant 0 : i32
    %c0_i32_0 = arith.constant 0 : i32
    return %arg0, %c0_i32 : i32, i32
  }
  func.func @transform_1(%arg0: i32) -> (i32, i32) {
    %c0_i32 = arith.constant 0 : i32
    %c0_i32_0 = arith.constant 0 : i32
    %c0_i32_1 = arith.constant 0 : i32
    return %c0_i32, %c0_i32_0 : i32, i32
  }
  func.func @transform_2(%arg0: i32) -> (i32, i32) {
    %c0_i32 = arith.constant 0 : i32
    %c0_i32_0 = arith.constant 0 : i32
    %c0_i32_1 = arith.constant 0 : i32
    return %c0_i32, %c0_i32_0 : i32, i32
  }
  func.func @transform_3(%arg0: i32) -> (i32, i32) {
    %c0_i32 = arith.constant 0 : i32
    %c0_i32_0 = arith.constant 0 : i32
    %c0_i32_1 = arith.constant 0 : i32
    return %c0_i32, %c0_i32_0 : i32, i32
  }
  func.func @transform_4(%arg0: i32) -> (i32, i32) {
    %c0_i32 = arith.constant 0 : i32
    %c0_i32_0 = arith.constant 0 : i32
    %c0_i32_1 = arith.constant 0 : i32
    return %c0_i32, %c0_i32_0 : i32, i32
  }
  func.func @transform_5(%arg0: i32) -> (i32, i32) {
    %c0_i32 = arith.constant 0 : i32
    %c0_i32_0 = arith.constant 0 : i32
    %c0_i32_1 = arith.constant 0 : i32
    return %c0_i32, %c0_i32_0 : i32, i32
  }
  func.func @transform_6(%arg0: i32) -> (i32, i32, i32) {
    %c0_i32 = arith.constant 0 : i32
    %c0_i32_0 = arith.constant 0 : i32
    %c0_i32_1 = arith.constant 0 : i32
    return %arg0, %c0_i32, %c0_i32_0 : i32, i32, i32
  }
}

</mosaic_0001>

<llo_original>
// kernel: tpu_custom_call.1
$region0: #{tpu_custom_call.1}
  #allocation0 [shape = 'u32[]', space=smem, size = 0x4, offset = 0x4, fixed_abs, tag = 'smem constant byte address 0x4 - core index']
  #allocation1 [shape = 'u32[144,128]{1,0:T(1,128)}', space=vmem, size = 0x12000, scoped, tag = 'internal scratch']
  %s0 = inlined_call_operand.vmem [shape: f32[1024,3], index: 0, kind: input, shape index: {}]
  %s1 = inlined_call_operand.vmem [shape: f32[1,32], index: 1, kind: input, shape index: {}]
  %s2 = inlined_call_operand.vmem [shape: f32[3,32], index: 2, kind: input, shape index: {}]
  %s3 = inlined_call_operand.vmem [shape: f32[1,32], index: 3, kind: input, shape index: {}]
  %s4 = inlined_call_operand.vmem [shape: f32[32,32], index: 4, kind: input, shape index: {}]
  %s5 = inlined_call_operand.vmem [shape: f32[1,32], index: 5, kind: input, shape index: {}]
  %s6 = inlined_call_operand.hbm [shape: f32[2,1,32], index: 6, kind: output, shape index: {}]
  %s7 = sld [smem:[#allocation0]]
  $region57: #{tpu_custom_call.1} parent=0
    _
  %s9 = ssub.s32 1, %s7
  %s10 = scalar_select 0, %s9, %s7
  $region1: #{tpu_custom_call.1} parent=0
    #allocation2 [shape = 'u8[1024]{0}', space=vmem, size = 0x400, scoped, tag = 'output window, operand 0']
    #allocation3 [shape = 's32[2]{0}', space=sflag, size = 0x8, scoped, tag = 'scoped memory for tpu_custom_call.1']
    %11 = vsyncpa [#allocation3], 0
    %s12 = scalar_lea.sflag [#allocation3], 1
    %13 = vsyncpa %s12, 0
    loop: start=0, step=1, limit=4
    $region2: #{tpu_custom_call.1} parent=1 // loop_pre_header
      _
    $region3: #{tpu_custom_call.1} parent=1 // loop_header
      %s15 = sphi 0, %s19
      %p16 = scmp.ge.s32.totalorder %s15, 4
      %s25 = sphi 0, %s27
      %s28 = sphi 0, %s25
      %s29 = sphi 0, %s28
      %s45 = sphi 0, %s29
      %s49 = sphi 0, %s49
      %s51 = sphi 0, %s49
      %s52 = sphi 0, %s51
      %s66 = sphi 0, %s52
      %s70 = sphi 0, %s70
      %s72 = sphi 0, %s70
      %s73 = sphi 0, %s72
      %s87 = sphi 0, %s73
      %s91 = sphi 0, %s91
      %s93 = sphi 0, %s91
      %s94 = sphi 0, %s93
      %s108 = sphi 0, %s94
      %s112 = sphi 0, %s112
      %s114 = sphi 0, %s112
      %s115 = sphi 0, %s114
      %s129 = sphi 0, %s115
      %s133 = sphi 0, %s133
      %s135 = sphi 0, %s133
      %s136 = sphi 0, %s135
      %s150 = sphi 0, %s136
      %s156 = sphi 0, %s158
      %s159 = sphi 0, %s156
      %s160 = sphi 0, %s159
      %s176 = sphi 0, %s160
    $region4: #{tpu_custom_call.1} parent=1 // loop_header_branch
      %18 = sbr.rel (%p16) target = $region8
    $region5: #{tpu_custom_call.1} parent=1 // loop_body
      %s20 = ssub.s32 %s15, 1
      %s21 = ssub.s32 %s15, 2
      %s22 = sadd.s32 %s15, 1
      %s23 = ssub.s32 %s15, %s22
      %p24 = scmp.eq.s32.totalorder %s23, 0
      %s26 = sadd.s32 %s25, 1
      %s27 = scalar_select %p24, %s25, %s26
      %p30 = pneg %p24
      %p31 = scmp.eq.s32.totalorder %s15, 1
      %p32 = por %p30, %p31
      %p33 = scmp.ne.s32.totalorder %s25, %s28
      %p34 = scmp.eq.s32.totalorder %s15, 0
      %p35 = por %p33, %p34
      %p36 = scmp.ne.s32.totalorder %s25, %s28
      %p37 = scmp.eq.s32.totalorder %s20, 1
      %p38 = por %p36, %p37
      %p39 = scmp.ne.s32.totalorder %s28, %s29
      %p40 = scmp.eq.s32.totalorder %s20, 0
      %p41 = por %p39, %p40
      %p42 = scmp.ne.s32.totalorder %s28, %s29
      %p43 = scmp.eq.s32.totalorder %s21, 1
      %p44 = por %p42, %p43
      %p46 = scmp.ne.s32.totalorder %s29, %s45
      %p47 = scmp.eq.s32.totalorder %s21, 0
      %p48 = por %p46, %p47
      %s50 = sadd.s32 %s49, 1
      %p53 = scmp.eq.s32.totalorder %s15, 1
      %p54 = scmp.ne.s32.totalorder %s49, %s51
      %p55 = scmp.eq.s32.totalorder %s15, 0
      %p56 = por %p54, %p55
      %p57 = scmp.ne.s32.totalorder %s49, %s51
      %p58 = scmp.eq.s32.totalorder %s20, 1
      %p59 = por %p57, %p58
      %p60 = scmp.ne.s32.totalorder %s51, %s52
      %p61 = scmp.eq.s32.totalorder %s20, 0
      %p62 = por %p60, %p61
      %p63 = scmp.ne.s32.totalorder %s51, %s52
      %p64 = scmp.eq.s32.totalorder %s21, 1
      %p65 = por %p63, %p64
      %p67 = scmp.ne.s32.totalorder %s52, %s66
      %p68 = scmp.eq.s32.totalorder %s21, 0
      %p69 = por %p67, %p68
      %s71 = sadd.s32 %s70, 1
      %p74 = scmp.eq.s32.totalorder %s15, 1
      %p75 = scmp.ne.s32.totalorder %s70, %s72
      %p76 = scmp.eq.s32.totalorder %s15, 0
      %p77 = por %p75, %p76
      %p78 = scmp.ne.s32.totalorder %s70, %s72
      %p79 = scmp.eq.s32.totalorder %s20, 1
      %p80 = por %p78, %p79
      %p81 = scmp.ne.s32.totalorder %s72, %s73
      %p82 = scmp.eq.s32.totalorder %s20, 0
      %p83 = por %p81, %p82
      %p84 = scmp.ne.s32.totalorder %s72, %s73
      %p85 = scmp.eq.s32.totalorder %s21, 1
      %p86 = por %p84, %p85
      %p88 = scmp.ne.s32.totalorder %s73, %s87
      %p89 = scmp.eq.s32.totalorder %s21, 0
      %p90 = por %p88, %p89
      %s92 = sadd.s32 %s91, 1
      %p95 = scmp.eq.s32.totalorder %s15, 1
      %p96 = scmp.ne.s32.totalorder %s91, %s93
      %p97 = scmp.eq.s32.totalorder %s15, 0
      %p98 = por %p96, %p97
      %p99 = scmp.ne.s32.totalorder %s91, %s93
      %p100 = scmp.eq.s32.totalorder %s20, 1
      %p101 = por %p99, %p100
      %p102 = scmp.ne.s32.totalorder %s93, %s94
      %p103 = scmp.eq.s32.totalorder %s20, 0
      %p104 = por %p102, %p103
      %p105 = scmp.ne.s32.totalorder %s93, %s94
      %p106 = scmp.eq.s32.totalorder %s21, 1
      %p107 = por %p105, %p106
      %p109 = scmp.ne.s32.totalorder %s94, %s108
      %p110 = scmp.eq.s32.totalorder %s21, 0
      %p111 = por %p109, %p110
      %s113 = sadd.s32 %s112, 1
      %p116 = scmp.eq.s32.totalorder %s15, 1
      %p117 = scmp.ne.s32.totalorder %s112, %s114
      %p118 = scmp.eq.s32.totalorder %s15, 0
      %p119 = por %p117, %p118
      %p120 = scmp.ne.s32.totalorder %s112, %s114
      %p121 = scmp.eq.s32.totalorder %s20, 1
      %p122 = por %p120, %p121
      %p123 = scmp.ne.s32.totalorder %s114, %s115
      %p124 = scmp.eq.s32.totalorder %s20, 0
      %p125 = por %p123, %p124
      %p126 = scmp.ne.s32.totalorder %s114, %s115
      %p127 = scmp.eq.s32.totalorder %s21, 1
      %p128 = por %p126, %p127
      %p130 = scmp.ne.s32.totalorder %s115, %s129
      %p131 = scmp.eq.s32.totalorder %s21, 0
      %p132 = por %p130, %p131
      %s134 = sadd.s32 %s133, 1
      %p137 = scmp.eq.s32.totalorder %s15, 1
      %p138 = scmp.ne.s32.totalorder %s133, %s135
      %p139 = scmp.eq.s32.totalorder %s15, 0
      %p140 = por %p138, %p139
      %p141 = scmp.ne.s32.totalorder %s133, %s135
      %p142 = scmp.eq.s32.totalorder %s20, 1
      %p143 = por %p141, %p142
      %p144 = scmp.ne.s32.totalorder %s135, %s136
      %p145 = scmp.eq.s32.totalorder %s20, 0
      %p146 = por %p144, %p145
      %p147 = scmp.ne.s32.totalorder %s135, %s136
      %p148 = scmp.eq.s32.totalorder %s21, 1
      %p149 = por %p147, %p148
      %p151 = scmp.ne.s32.totalorder %s136, %s150
      %p152 = scmp.eq.s32.totalorder %s21, 0
      %p153 = por %p151, %p152
      %s154 = ssub.s32 %s15, %s22
      %p155 = scmp.eq.s32.totalorder %s154, 0
      %s157 = sadd.s32 %s156, 1
      %s158 = scalar_select %p155, %s156, %s157
      %p161 = pneg %p155
      %p162 = scmp.eq.s32.totalorder %s15, 1
      %p163 = por %p161, %p162
      %p164 = scmp.ne.s32.totalorder %s156, %s159
      %p165 = scmp.eq.s32.totalorder %s15, 0
      %p166 = por %p164, %p165
      %p167 = scmp.ne.s32.totalorder %s156, %s159
      %p168 = scmp.eq.s32.totalorder %s20, 1
      %p169 = por %p167, %p168
      %p170 = scmp.ne.s32.totalorder %s159, %s160
      %p171 = scmp.eq.s32.totalorder %s20, 0
      %p172 = por %p170, %p171
      %p173 = scmp.ne.s32.totalorder %s159, %s160
      %p174 = scmp.eq.s32.totalorder %s21, 1
      %p175 = por %p173, %p174
      %p177 = scmp.ne.s32.totalorder %s160, %s176
      %p178 = scmp.eq.s32.totalorder %s21, 0
      %p179 = por %p177, %p178
      %p180 = scmp.le.s32.totalorder 1, %s15
      %p181 = scmp.lt.s32.totalorder %s15, 3
      %p182 = pnand %p180, %p181
      %p183 = pneg %p182
      // Predicated region
      $region9: #{tpu_custom_call.1} parent=5 // pred_check
        _
      $region10: #{tpu_custom_call.1} parent=5 // pred_check_branch
        %185 = sbr.rel (%p182) target = $region12
      $region11: #{tpu_custom_call.1} parent=5 // pred_region
        %s186 = ssub.s32 %s15, 1
        // Predicated region
        $region13: #{tpu_custom_call.1} parent=11 // pred_check
          %p187 = pneg %p62
        $region14: #{tpu_custom_call.1} parent=11 // pred_check_branch
          %189 = sbr.rel (%p187) target = $region16
        $region15: #{tpu_custom_call.1} parent=11 // pred_region
          _
        $region16: #{tpu_custom_call.1} parent=11 // pred_fallthru
          _
        // Predicated region
        $region17: #{tpu_custom_call.1} parent=11 // pred_check
          %p190 = pneg %p83
        $region18: #{tpu_custom_call.1} parent=11 // pred_check_branch
          %192 = sbr.rel (%p190) target = $region20
        $region19: #{tpu_custom_call.1} parent=11 // pred_region
          _
        $region20: #{tpu_custom_call.1} parent=11 // pred_fallthru
          _
        // Predicated region
        $region21: #{tpu_custom_call.1} parent=11 // pred_check
          %p193 = pneg %p104
        $region22: #{tpu_custom_call.1} parent=11 // pred_check_branch
          %195 = sbr.rel (%p193) target = $region24
        $region23: #{tpu_custom_call.1} parent=11 // pred_region
          _
        $region24: #{tpu_custom_call.1} parent=11 // pred_fallthru
          _
        // Predicated region
        $region25: #{tpu_custom_call.1} parent=11 // pred_check
          %p196 = pneg %p125
        $region26: #{tpu_custom_call.1} parent=11 // pred_check_branch
          %198 = sbr.rel (%p196) target = $region28
        $region27: #{tpu_custom_call.1} parent=11 // pred_region
          _
        $region28: #{tpu_custom_call.1} parent=11 // pred_fallthru
          _
        // Predicated region
        $region29: #{tpu_custom_call.1} parent=11 // pred_check
          %p199 = pneg %p146
        $region30: #{tpu_custom_call.1} parent=11 // pred_check_branch
          %201 = sbr.rel (%p199) target = $region32
        $region31: #{tpu_custom_call.1} parent=11 // pred_region
          _
        $region32: #{tpu_custom_call.1} parent=11 // pred_fallthru
          _
      $region12: #{tpu_custom_call.1} parent=5 // pred_fallthru
        _
      %p202 = scmp.lt.s32.totalorder %s15, 2
      // Predicated region
      $region33: #{tpu_custom_call.1} parent=5 // pred_check
        %p203 = pneg %p202
      $region34: #{tpu_custom_call.1} parent=5 // pred_check_branch
        %205 = sbr.rel (%p203) target = $region36
      $region35: #{tpu_custom_call.1} parent=5 // pred_region
        // Predicated region
        $region37: #{tpu_custom_call.1} parent=35 // pred_check
          %p206 = pneg %p35
        $region38: #{tpu_custom_call.1} parent=35 // pred_check_branch
          %208 = sbr.rel (%p206) target = $region40
        $region39: #{tpu_custom_call.1} parent=35 // pred_region
          %s209 = smul.u32 64, %s15
          %p210 = scmp.lt.s32.totalorder %s209, 127
          %s211 = scalar_select %p210, %s209, 127
          %s212 = smul.addr %s211, 8
          %s213 = scalar_lea.vmem %s0, %s212
          %s214 = smul.u32 64, %s15
        $region40: #{tpu_custom_call.1} parent=35 // pred_fallthru
          _
      $region36: #{tpu_custom_call.1} parent=5 // pred_fallthru
        _
      %p215 = scmp.le.s32.totalorder 1, %s15
      %p216 = scmp.lt.s32.totalorder %s15, 3
      %p217 = pnand %p215, %p216
      %p218 = pneg %p217
      // Predicated region
      $region41: #{tpu_custom_call.1} parent=5 // pred_check
        _
      $region42: #{tpu_custom_call.1} parent=5 // pred_check_branch
        %220 = sbr.rel (%p217) target = $region44
      $region43: #{tpu_custom_call.1} parent=5 // pred_region
        %s221 = ssub.s32 %s15, 1
        %s222 = smul.u32 64, %s20
        %p223 = scmp.lt.s32.totalorder %s222, 127
        %s224 = scalar_select %p223, %s222, 127
        %s225 = smul.addr %s224, 8
        %s226 = scalar_lea.vmem %s0, %s225
        %p227 = pneg %p41
        %p228 = pneg %p38
        %p229 = pneg %p62
        %p230 = pneg %p59
        %p231 = pneg %p83
        %p232 = pneg %p80
        %p233 = pneg %p104
        %p234 = pneg %p101
        %p235 = pneg %p125
        %p236 = pneg %p122
        %p237 = pneg %p146
        %p238 = pneg %p143
        %p239 = pneg %p172
        %p240 = pneg %p169
        %s241 = sand.u32 %s159, 1
        %s242 = scalar_lea.sflag [#allocation3], %s241
        %s243 = sand.u32 %s159, 1
        %s244 = scalar_lea.vmem [#allocation2], %s243
        %s245 = smul.u32 64, %s20
        %p246 = scmp.lt.s32.totalorder %s245, 127
        %s247 = scalar_select %p246, %s245, 127
        %s248 = smul.addr %s247, 8
        %s249 = scalar_lea.vmem %s0, %s248
        %s250 = smul.u32 64, %s20
        %v251 = vld [vmem:[%s249] sm:$0xff]
        %v252 = vld [vmem:[%s249 + $0x8] sm:$0xff]
        %v253 = vld [vmem:[%s249 + $0x10] sm:$0xff]
        %v254 = vld [vmem:[%s249 + $0x18] sm:$0xff]
        %v255 = vld [vmem:[%s249 + $0x20] sm:$0xff]
        %v256 = vld [vmem:[%s249 + $0x28] sm:$0xff]
        %v257 = vld [vmem:[%s249 + $0x30] sm:$0xff]
        %v258 = vld [vmem:[%s249 + $0x38] sm:$0xff]
        %v259 = vld [vmem:[%s249 + $0x40] sm:$0xff]
        %v260 = vld [vmem:[%s249 + $0x48] sm:$0xff]
        %v261 = vld [vmem:[%s249 + $0x50] sm:$0xff]
        %v262 = vld [vmem:[%s249 + $0x58] sm:$0xff]
        %v263 = vld [vmem:[%s249 + $0x60] sm:$0xff]
        %v264 = vld [vmem:[%s249 + $0x68] sm:$0xff]
        %v265 = vld [vmem:[%s249 + $0x70] sm:$0xff]
        %v266 = vld [vmem:[%s249 + $0x78] sm:$0xff]
        %v267 = vld [vmem:[%s249 + $0x80] sm:$0xff]
        %v268 = vld [vmem:[%s249 + $0x88] sm:$0xff]
        %v269 = vld [vmem:[%s249 + $0x90] sm:$0xff]
        %v270 = vld [vmem:[%s249 + $0x98] sm:$0xff]
        %v271 = vld [vmem:[%s249 + $0xa0] sm:$0xff]
        %v272 = vld [vmem:[%s249 + $0xa8] sm:$0xff]
        %v273 = vld [vmem:[%s249 + $0xb0] sm:$0xff]
        %v274 = vld [vmem:[%s249 + $0xb8] sm:$0xff]
        %v275 = vld [vmem:[%s249 + $0xc0] sm:$0xff]
        %v276 = vld [vmem:[%s249 + $0xc8] sm:$0xff]
        %v277 = vld [vmem:[%s249 + $0xd0] sm:$0xff]
        %v278 = vld [vmem:[%s249 + $0xd8] sm:$0xff]
        %v279 = vld [vmem:[%s249 + $0xe0] sm:$0xff]
        %v280 = vld [vmem:[%s249 + $0xe8] sm:$0xff]
        %v281 = vld [vmem:[%s249 + $0xf0] sm:$0xff]
        %v282 = vld [vmem:[%s249 + $0xf8] sm:$0xff]
        %v283 = vld [vmem:[%s249 + $0x100] sm:$0xff]
        %v284 = vld [vmem:[%s249 + $0x108] sm:$0xff]
        %v285 = vld [vmem:[%s249 + $0x110] sm:$0xff]
        %v286 = vld [vmem:[%s249 + $0x118] sm:$0xff]
        %v287 = vld [vmem:[%s249 + $0x120] sm:$0xff]
        %v288 = vld [vmem:[%s249 + $0x128] sm:$0xff]
        %v289 = vld [vmem:[%s249 + $0x130] sm:$0xff]
        %v290 = vld [vmem:[%s249 + $0x138] sm:$0xff]
        %v291 = vld [vmem:[%s249 + $0x140] sm:$0xff]
        %v292 = vld [vmem:[%s249 + $0x148] sm:$0xff]
        %v293 = vld [vmem:[%s249 + $0x150] sm:$0xff]
        %v294 = vld [vmem:[%s249 + $0x158] sm:$0xff]
        %v295 = vld [vmem:[%s249 + $0x160] sm:$0xff]
        %v296 = vld [vmem:[%s249 + $0x168] sm:$0xff]
        %v297 = vld [vmem:[%s249 + $0x170] sm:$0xff]
        %v298 = vld [vmem:[%s249 + $0x178] sm:$0xff]
        %v299 = vld [vmem:[%s249 + $0x180] sm:$0xff]
        %v300 = vld [vmem:[%s249 + $0x188] sm:$0xff]
        %v301 = vld [vmem:[%s249 + $0x190] sm:$0xff]
        %v302 = vld [vmem:[%s249 + $0x198] sm:$0xff]
        %v303 = vld [vmem:[%s249 + $0x1a0] sm:$0xff]
        %v304 = vld [vmem:[%s249 + $0x1a8] sm:$0xff]
        %v305 = vld [vmem:[%s249 + $0x1b0] sm:$0xff]
        %v306 = vld [vmem:[%s249 + $0x1b8] sm:$0xff]
        %v307 = vld [vmem:[%s249 + $0x1c0] sm:$0xff]
        %v308 = vld [vmem:[%s249 + $0x1c8] sm:$0xff]
        %v309 = vld [vmem:[%s249 + $0x1d0] sm:$0xff]
        %v310 = vld [vmem:[%s249 + $0x1d8] sm:$0xff]
        %v311 = vld [vmem:[%s249 + $0x1e0] sm:$0xff]
        %v312 = vld [vmem:[%s249 + $0x1e8] sm:$0xff]
        %v313 = vld [vmem:[%s249 + $0x1f0] sm:$0xff]
        %v314 = vld [vmem:[%s249 + $0x1f8] sm:$0xff]
        %v315 = vld [vmem:[%s2] sm:$0x7]
        %v316 = vld [vmem:[%s3] sm:$0x1]
        %v318 = vlaneseq
        %v319 = vshrl.u32 %v318, 7
        %v320 = vsub.s32 0, %v319
        %v321 = vrot.slane %v316, %v320
        %vm323 = vcmask 23552
        %v325 = vsel %vm323, %v251, 0
        %v328 = vsel %vm323, %v252, 0
        %v331 = vsel %vm323, %v253, 0
        %v334 = vsel %vm323, %v254, 0
        %v337 = vsel %vm323, %v255, 0
        %v340 = vsel %vm323, %v256, 0
        %v343 = vsel %vm323, %v257, 0
        %v346 = vsel %vm323, %v258, 0
        %v349 = vsel %vm323, %v259, 0
        %v352 = vsel %vm323, %v260, 0
        %v355 = vsel %vm323, %v261, 0
        %v358 = vsel %vm323, %v262, 0
        %v361 = vsel %vm323, %v263, 0
        %v364 = vsel %vm323, %v264, 0
        %v367 = vsel %vm323, %v265, 0
        %v370 = vsel %vm323, %v266, 0
        %v373 = vsel %vm323, %v267, 0
        %v376 = vsel %vm323, %v268, 0
        %v379 = vsel %vm323, %v269, 0
        %v382 = vsel %vm323, %v270, 0
        %v385 = vsel %vm323, %v271, 0
        %v388 = vsel %vm323, %v272, 0
        %v391 = vsel %vm323, %v273, 0
        %v394 = vsel %vm323, %v274, 0
        %v397 = vsel %vm323, %v275, 0
        %v400 = vsel %vm323, %v276, 0
        %v403 = vsel %vm323, %v277, 0
        %v406 = vsel %vm323, %v278, 0
        %v409 = vsel %vm323, %v279, 0
        %v412 = vsel %vm323, %v280, 0
        %v415 = vsel %vm323, %v281, 0
        %v418 = vsel %vm323, %v282, 0
        %v421 = vsel %vm323, %v283, 0
        %v424 = vsel %vm323, %v284, 0
        %v427 = vsel %vm323, %v285, 0
        %v430 = vsel %vm323, %v286, 0
        %v433 = vsel %vm323, %v287, 0
        %v436 = vsel %vm323, %v288, 0
        %v439 = vsel %vm323, %v289, 0
        %v442 = vsel %vm323, %v290, 0
        %v445 = vsel %vm323, %v291, 0
        %v448 = vsel %vm323, %v292, 0
        %v451 = vsel %vm323, %v293, 0
        %v454 = vsel %vm323, %v294, 0
        %v457 = vsel %vm323, %v295, 0
        %v460 = vsel %vm323, %v296, 0
        %v463 = vsel %vm323, %v297, 0
        %v466 = vsel %vm323, %v298, 0
        %v469 = vsel %vm323, %v299, 0
        %v472 = vsel %vm323, %v300, 0
        %v475 = vsel %vm323, %v301, 0
        %v478 = vsel %vm323, %v302, 0
        %v481 = vsel %vm323, %v303, 0
        %v484 = vsel %vm323, %v304, 0
        %v487 = vsel %vm323, %v305, 0
        %v490 = vsel %vm323, %v306, 0
        %v493 = vsel %vm323, %v307, 0
        %v496 = vsel %vm323, %v308, 0
        %v499 = vsel %vm323, %v309, 0
        %v502 = vsel %vm323, %v310, 0
        %v505 = vsel %vm323, %v311, 0
        %v508 = vsel %vm323, %v312, 0
        %v511 = vsel %vm323, %v313, 0
        %v514 = vsel %vm323, %v314, 0
        %vm516 = vcmask 1042432
        %v518 = vsel %vm516, %v315, 0
        %520 = vmatprep.subr.mxu0 0.0
        %521 = vmatpush1.msra.mxu0 %v518
        %522 = vmatprep.subr.mxu0 0.0
        %523 = vmatpush1.msra.mxu0 0.0
        %524 = vmatprep.subr.mxu0 0.0
        %525 = vmatpush1.msra.mxu0 0.0
        %526 = vmatprep.subr.mxu0 0.0
        %527 = vmatpush1.msra.mxu0 0.0
        %528 = vmatprep.subr.mxu0 0.0
        %529 = vmatpush1.msra.mxu0 0.0
        %530 = vmatprep.subr.mxu0 0.0
        %531 = vmatpush1.msra.mxu0 0.0
        %532 = vmatprep.subr.mxu0 0.0
        %533 = vmatpush1.msra.mxu0 0.0
        %534 = vmatprep.subr.mxu0 0.0
        %535 = vmatpush1.msra.mxu0 0.0
        %536 = vmatprep.subr.mxu0 0.0
        %537 = vmatpush1.msra.mxu0 0.0
        %538 = vmatprep.subr.mxu0 0.0
        %539 = vmatpush1.msra.mxu0 0.0
        %540 = vmatprep.subr.mxu0 0.0
        %541 = vmatpush1.msra.mxu0 0.0
        %542 = vmatprep.subr.mxu0 0.0
        %543 = vmatpush1.msra.mxu0 0.0
        %544 = vmatprep.subr.mxu0 0.0
        %545 = vmatpush1.msra.mxu0 0.0
        %546 = vmatprep.subr.mxu0 0.0
        %547 = vmatpush1.msra.mxu0 0.0
        %548 = vmatprep.subr.mxu0 0.0
        %549 = vmatpush1.msra.mxu0 0.0
        %550 = vmatprep.subr.mxu0 0.0
        %551 = vmatpush1.msra.mxu0 0.0
        %552 = vmatprep.subr.mxu0 0.0
        %553 = vmatpush1.msra.mxu0 0.0
        %554 = vmatprep.subr.mxu0 0.0
        %555 = vmatpush1.msra.mxu0 0.0
        %556 = vmatprep.subr.mxu0 0.0
        %557 = vmatpush1.msra.mxu0 0.0
        %558 = vmatprep.subr.mxu0 0.0
        %559 = vmatpush1.msra.mxu0 0.0
        %560 = vmatprep.subr.mxu0 0.0
        %561 = vmatpush1.msra.mxu0 0.0
        %562 = vmatprep.subr.mxu0 0.0
        %563 = vmatpush1.msra.mxu0 0.0
        %564 = vmatprep.subr.mxu0 0.0
        %565 = vmatpush1.msra.mxu0 0.0
        %566 = vmatprep.subr.mxu0 0.0
        %567 = vmatpush1.msra.mxu0 0.0
        %568 = vmatprep.subr.mxu0 0.0
        %569 = vmatpush1.msra.mxu0 0.0
        %570 = vmatprep.subr.mxu0 0.0
        %571 = vmatpush1.msra.mxu0 0.0
        %572 = vmatprep.subr.mxu0 0.0
        %573 = vmatpush1.msra.mxu0 0.0
        %574 = vmatprep.subr.mxu0 0.0
        %575 = vmatpush1.msra.mxu0 0.0
        %576 = vmatprep.subr.mxu0 0.0
        %577 = vmatpush1.msra.mxu0 0.0
        %578 = vmatprep.subr.mxu0 0.0
        %579 = vmatpush1.msra.mxu0 0.0
        %580 = vmatprep.subr.mxu0 0.0
        %581 = vmatpush1.msra.mxu0 0.0
        %582 = vmatprep.subr.mxu0 0.0
        %583 = vmatpush1.msra.mxu0 0.0
        %584 = vmatprep.mubr.f32.mxu0 0.0
        %585 = vmatmul.mubr.f32.gmra.mrb[0].mxu0 %v325
        %v586 = vpop.f32.mrb[0].mxu0
        %v587 = vadd.f32 %v321, %v586
        %v588 = vpop.f32.mrb[0].mxu0
        %589 = vmatprep.mubr.f32.mxu0 0.0
        %590 = vmatmul.mubr.f32.gmra.mrb[0].mxu0 %v328
        %v591 = vpop.f32.mrb[0].mxu0
        %v592 = vadd.f32 %v321, %v591
        %v593 = vpop.f32.mrb[0].mxu0
        %594 = vmatprep.mubr.f32.mxu0 0.0
        %595 = vmatmul.mubr.f32.gmra.mrb[0].mxu0 %v331
        %v596 = vpop.f32.mrb[0].mxu0
        %v597 = vadd.f32 %v321, %v596
        %v598 = vpop.f32.mrb[0].mxu0
        %599 = vmatprep.mubr.f32.mxu0 0.0
        %600 = vmatmul.mubr.f32.gmra.mrb[0].mxu0 %v334
        %v601 = vpop.f32.mrb[0].mxu0
        %v602 = vadd.f32 %v321, %v601
        %v603 = vpop.f32.mrb[0].mxu0
        %604 = vmatprep.mubr.f32.mxu0 0.0
        %605 = vmatmul.mubr.f32.gmra.mrb[0].mxu0 %v337
        %v606 = vpop.f32.mrb[0].mxu0
        %v607 = vadd.f32 %v321, %v606
        %v608 = vpop.f32.mrb[0].mxu0
        %609 = vmatprep.mubr.f32.mxu0 0.0
        %610 = vmatmul.mubr.f32.gmra.mrb[0].mxu0 %v340
        %v611 = vpop.f32.mrb[0].mxu0
        %v612 = vadd.f32 %v321, %v611
        %v613 = vpop.f32.mrb[0].mxu0
        %614 = vmatprep.mubr.f32.mxu0 0.0
        %615 = vmatmul.mubr.f32.gmra.mrb[0].mxu0 %v343
        %v616 = vpop.f32.mrb[0].mxu0
        %v617 = vadd.f32 %v321, %v616
        %v618 = vpop.f32.mrb[0].mxu0
        %619 = vmatprep.mubr.f32.mxu0 0.0
        %620 = vmatmul.mubr.f32.gmra.mrb[0].mxu0 %v346
        %v621 = vpop.f32.mrb[0].mxu0
        %v622 = vadd.f32 %v321, %v621
        %v623 = vpop.f32.mrb[0].mxu0
        %624 = vmatprep.mubr.f32.mxu0 0.0
        %625 = vmatmul.mubr.f32.gmra.mrb[0].mxu0 %v349
        %v626 = vpop.f32.mrb[0].mxu0
        %v627 = vadd.f32 %v321, %v626
        %v628 = vpop.f32.mrb[0].mxu0
        %629 = vmatprep.mubr.f32.mxu0 0.0
        %630 = vmatmul.mubr.f32.gmra.mrb[0].mxu0 %v352
        %v631 = vpop.f32.mrb[0].mxu0
        %v632 = vadd.f32 %v321, %v631
        %v633 = vpop.f32.mrb[0].mxu0
        %634 = vmatprep.mubr.f32.mxu0 0.0
        %635 = vmatmul.mubr.f32.gmra.mrb[0].mxu0 %v355
        %v636 = vpop.f32.mrb[0].mxu0
        %v637 = vadd.f32 %v321, %v636
        %v638 = vpop.f32.mrb[0].mxu0
        %639 = vmatprep.mubr.f32.mxu0 0.0
        %640 = vmatmul.mubr.f32.gmra.mrb[0].mxu0 %v358
        %v641 = vpop.f32.mrb[0].mxu0
        %v642 = vadd.f32 %v321, %v641
        %v643 = vpop.f32.mrb[0].mxu0
        %644 = vmatprep.mubr.f32.mxu0 0.0
        %645 = vmatmul.mubr.f32.gmra.mrb[0].mxu0 %v361
        %v646 = vpop.f32.mrb[0].mxu0
        %v647 = vadd.f32 %v321, %v646
        %v648 = vpop.f32.mrb[0].mxu0
        %649 = vmatprep.mubr.f32.mxu0 0.0
        %650 = vmatmul.mubr.f32.gmra.mrb[0].mxu0 %v364
        %v651 = vpop.f32.mrb[0].mxu0
        %v652 = vadd.f32 %v321, %v651
        %v653 = vpop.f32.mrb[0].mxu0
        %654 = vmatprep.mubr.f32.mxu0 0.0
        %655 = vmatmul.mubr.f32.gmra.mrb[0].mxu0 %v367
        %v656 = vpop.f32.mrb[0].mxu0
        %v657 = vadd.f32 %v321, %v656
        %v658 = vpop.f32.mrb[0].mxu0
        %659 = vmatprep.mubr.f32.mxu0 0.0
        %660 = vmatmul.mubr.f32.gmra.mrb[0].mxu0 %v370
        %v661 = vpop.f32.mrb[0].mxu0
        %v662 = vadd.f32 %v321, %v661
        %v663 = vpop.f32.mrb[0].mxu0
        %664 = vmatprep.mubr.f32.mxu0 0.0
        %665 = vmatmul.mubr.f32.gmra.mrb[0].mxu0 %v373
        %v666 = vpop.f32.mrb[0].mxu0
        %v667 = vadd.f32 %v321, %v666
        %v668 = vpop.f32.mrb[0].mxu0
        %669 = vmatprep.mubr.f32.mxu0 0.0
        %670 = vmatmul.mubr.f32.gmra.mrb[0].mxu0 %v376
        %v671 = vpop.f32.mrb[0].mxu0
        %v672 = vadd.f32 %v321, %v671
        %v673 = vpop.f32.mrb[0].mxu0
        %674 = vmatprep.mubr.f32.mxu0 0.0
        %675 = vmatmul.mubr.f32.gmra.mrb[0].mxu0 %v379
        %v676 = vpop.f32.mrb[0].mxu0
        %v677 = vadd.f32 %v321, %v676
        %v678 = vpop.f32.mrb[0].mxu0
        %679 = vmatprep.mubr.f32.mxu0 0.0
        %680 = vmatmul.mubr.f32.gmra.mrb[0].mxu0 %v382
        %v681 = vpop.f32.mrb[0].mxu0
        %v682 = vadd.f32 %v321, %v681
        %v683 = vpop.f32.mrb[0].mxu0
        %684 = vmatprep.mubr.f32.mxu0 0.0
        %685 = vmatmul.mubr.f32.gmra.mrb[0].mxu0 %v385
        %v686 = vpop.f32.mrb[0].mxu0
        %v687 = vadd.f32 %v321, %v686
        %v688 = vpop.f32.mrb[0].mxu0
        %689 = vmatprep.mubr.f32.mxu0 0.0
        %690 = vmatmul.mubr.f32.gmra.mrb[0].mxu0 %v388
        %v691 = vpop.f32.mrb[0].mxu0
        %v692 = vadd.f32 %v321, %v691
        %v693 = vpop.f32.mrb[0].mxu0
        %694 = vmatprep.mubr.f32.mxu0 0.0
        %695 = vmatmul.mubr.f32.gmra.mrb[0].mxu0 %v391
        %v696 = vpop.f32.mrb[0].mxu0
        %v697 = vadd.f32 %v321, %v696
        %v698 = vpop.f32.mrb[0].mxu0
        %699 = vmatprep.mubr.f32.mxu0 0.0
        %700 = vmatmul.mubr.f32.gmra.mrb[0].mxu0 %v394
        %v701 = vpop.f32.mrb[0].mxu0
        %v702 = vadd.f32 %v321, %v701
        %v703 = vpop.f32.mrb[0].mxu0
        %704 = vmatprep.mubr.f32.mxu0 0.0
        %705 = vmatmul.mubr.f32.gmra.mrb[0].mxu0 %v397
        %v706 = vpop.f32.mrb[0].mxu0
        %v707 = vadd.f32 %v321, %v706
        %v708 = vpop.f32.mrb[0].mxu0
        %709 = vmatprep.mubr.f32.mxu0 0.0
        %710 = vmatmul.mubr.f32.gmra.mrb[0].mxu0 %v400
        %v711 = vpop.f32.mrb[0].mxu0
        %v712 = vadd.f32 %v321, %v711
        %v713 = vpop.f32.mrb[0].mxu0
        %714 = vmatprep.mubr.f32.mxu0 0.0
        %715 = vmatmul.mubr.f32.gmra.mrb[0].mxu0 %v403
        %v716 = vpop.f32.mrb[0].mxu0
        %v717 = vadd.f32 %v321, %v716
        %v718 = vpop.f32.mrb[0].mxu0
        %719 = vmatprep.mubr.f32.mxu0 0.0
        %720 = vmatmul.mubr.f32.gmra.mrb[0].mxu0 %v406
        %v721 = vpop.f32.mrb[0].mxu0
        %v722 = vadd.f32 %v321, %v721
        %v723 = vpop.f32.mrb[0].mxu0
        %724 = vmatprep.mubr.f32.mxu0 0.0
        %725 = vmatmul.mubr.f32.gmra.mrb[0].mxu0 %v409
        %v726 = vpop.f32.mrb[0].mxu0
        %v727 = vadd.f32 %v321, %v726
        %v728 = vpop.f32.mrb[0].mxu0
        %729 = vmatprep.mubr.f32.mxu0 0.0
        %730 = vmatmul.mubr.f32.gmra.mrb[0].mxu0 %v412
        %v731 = vpop.f32.mrb[0].mxu0
        %v732 = vadd.f32 %v321, %v731
        %v733 = vpop.f32.mrb[0].mxu0
        %734 = vmatprep.mubr.f32.mxu0 0.0
        %735 = vmatmul.mubr.f32.gmra.mrb[0].mxu0 %v415
        %v736 = vpop.f32.mrb[0].mxu0
        %v737 = vadd.f32 %v321, %v736
        %v738 = vpop.f32.mrb[0].mxu0
        %739 = vmatprep.mubr.f32.mxu0 0.0
        %740 = vmatmul.mubr.f32.gmra.mrb[0].mxu0 %v418
        %v741 = vpop.f32.mrb[0].mxu0
        %v742 = vadd.f32 %v321, %v741
        %v743 = vpop.f32.mrb[0].mxu0
        %744 = vmatprep.mubr.f32.mxu0 0.0
        %745 = vmatmul.mubr.f32.gmra.mrb[0].mxu0 %v421
        %v746 = vpop.f32.mrb[0].mxu0
        %v747 = vadd.f32 %v321, %v746
        %v748 = vpop.f32.mrb[0].mxu0
        %749 = vmatprep.mubr.f32.mxu0 0.0
        %750 = vmatmul.mubr.f32.gmra.mrb[0].mxu0 %v424
        %v751 = vpop.f32.mrb[0].mxu0
        %v752 = vadd.f32 %v321, %v751
        %v753 = vpop.f32.mrb[0].mxu0
        %754 = vmatprep.mubr.f32.mxu0 0.0
        %755 = vmatmul.mubr.f32.gmra.mrb[0].mxu0 %v427
        %v756 = vpop.f32.mrb[0].mxu0
        %v757 = vadd.f32 %v321, %v756
        %v758 = vpop.f32.mrb[0].mxu0
        %759 = vmatprep.mubr.f32.mxu0 0.0
        %760 = vmatmul.mubr.f32.gmra.mrb[0].mxu0 %v430
        %v761 = vpop.f32.mrb[0].mxu0
        %v762 = vadd.f32 %v321, %v761
        %v763 = vpop.f32.mrb[0].mxu0
        %764 = vmatprep.mubr.f32.mxu0 0.0
        %765 = vmatmul.mubr.f32.gmra.mrb[0].mxu0 %v433
        %v766 = vpop.f32.mrb[0].mxu0
        %v767 = vadd.f32 %v321, %v766
        %v768 = vpop.f32.mrb[0].mxu0
        %769 = vmatprep.mubr.f32.mxu0 0.0
        %770 = vmatmul.mubr.f32.gmra.mrb[0].mxu0 %v436
        %v771 = vpop.f32.mrb[0].mxu0
        %v772 = vadd.f32 %v321, %v771
        %v773 = vpop.f32.mrb[0].mxu0
        %774 = vmatprep.mubr.f32.mxu0 0.0
        %775 = vmatmul.mubr.f32.gmra.mrb[0].mxu0 %v439
        %v776 = vpop.f32.mrb[0].mxu0
        %v777 = vadd.f32 %v321, %v776
        %v778 = vpop.f32.mrb[0].mxu0
        %779 = vmatprep.mubr.f32.mxu0 0.0
        %780 = vmatmul.mubr.f32.gmra.mrb[0].mxu0 %v442
        %v781 = vpop.f32.mrb[0].mxu0
        %v782 = vadd.f32 %v321, %v781
        %v783 = vpop.f32.mrb[0].mxu0
        %784 = vmatprep.mubr.f32.mxu0 0.0
        %785 = vmatmul.mubr.f32.gmra.mrb[0].mxu0 %v445
        %v786 = vpop.f32.mrb[0].mxu0
        %v787 = vadd.f32 %v321, %v786
        %v788 = vpop.f32.mrb[0].mxu0
        %789 = vmatprep.mubr.f32.mxu0 0.0
        %790 = vmatmul.mubr.f32.gmra.mrb[0].mxu0 %v448
        %v791 = vpop.f32.mrb[0].mxu0
        %v792 = vadd.f32 %v321, %v791
        %v793 = vpop.f32.mrb[0].mxu0
        %794 = vmatprep.mubr.f32.mxu0 0.0
        %795 = vmatmul.mubr.f32.gmra.mrb[0].mxu0 %v451
        %v796 = vpop.f32.mrb[0].mxu0
        %v797 = vadd.f32 %v321, %v796
        %v798 = vpop.f32.mrb[0].mxu0
        %799 = vmatprep.mubr.f32.mxu0 0.0
        %800 = vmatmul.mubr.f32.gmra.mrb[0].mxu0 %v454
        %v801 = vpop.f32.mrb[0].mxu0
        %v802 = vadd.f32 %v321, %v801
        %v803 = vpop.f32.mrb[0].mxu0
        %804 = vmatprep.mubr.f32.mxu0 0.0
        %805 = vmatmul.mubr.f32.gmra.mrb[0].mxu0 %v457
        %v806 = vpop.f32.mrb[0].mxu0
        %v807 = vadd.f32 %v321, %v806
        %v808 = vpop.f32.mrb[0].mxu0
        %809 = vmatprep.mubr.f32.mxu0 0.0
        %810 = vmatmul.mubr.f32.gmra.mrb[0].mxu0 %v460
        %v811 = vpop.f32.mrb[0].mxu0
        %v812 = vadd.f32 %v321, %v811
        %v813 = vpop.f32.mrb[0].mxu0
        %814 = vmatprep.mubr.f32.mxu0 0.0
        %815 = vmatmul.mubr.f32.gmra.mrb[0].mxu0 %v463
        %v816 = vpop.f32.mrb[0].mxu0
        %v817 = vadd.f32 %v321, %v816
        %v818 = vpop.f32.mrb[0].mxu0
        %819 = vmatprep.mubr.f32.mxu0 0.0
        %820 = vmatmul.mubr.f32.gmra.mrb[0].mxu0 %v466
        %v821 = vpop.f32.mrb[0].mxu0
        %v822 = vadd.f32 %v321, %v821
        %v823 = vpop.f32.mrb[0].mxu0
        %824 = vmatprep.mubr.f32.mxu0 0.0
        %825 = vmatmul.mubr.f32.gmra.mrb[0].mxu0 %v469
        %v826 = vpop.f32.mrb[0].mxu0
        %v827 = vadd.f32 %v321, %v826
        %v828 = vpop.f32.mrb[0].mxu0
        %829 = vmatprep.mubr.f32.mxu0 0.0
        %830 = vmatmul.mubr.f32.gmra.mrb[0].mxu0 %v472
        %v831 = vpop.f32.mrb[0].mxu0
        %v832 = vadd.f32 %v321, %v831
        %v833 = vpop.f32.mrb[0].mxu0
        %834 = vmatprep.mubr.f32.mxu0 0.0
        %835 = vmatmul.mubr.f32.gmra.mrb[0].mxu0 %v475
        %v836 = vpop.f32.mrb[0].mxu0
        %v837 = vadd.f32 %v321, %v836
        %v838 = vpop.f32.mrb[0].mxu0
        %839 = vmatprep.mubr.f32.mxu0 0.0
        %840 = vmatmul.mubr.f32.gmra.mrb[0].mxu0 %v478
        %v841 = vpop.f32.mrb[0].mxu0
        %v842 = vadd.f32 %v321, %v841
        %v843 = vpop.f32.mrb[0].mxu0
        %844 = vmatprep.mubr.f32.mxu0 0.0
        %845 = vmatmul.mubr.f32.gmra.mrb[0].mxu0 %v481
        %v846 = vpop.f32.mrb[0].mxu0
        %v847 = vadd.f32 %v321, %v846
        %v848 = vpop.f32.mrb[0].mxu0
        %849 = vmatprep.mubr.f32.mxu0 0.0
        %850 = vmatmul.mubr.f32.gmra.mrb[0].mxu0 %v484
        %v851 = vpop.f32.mrb[0].mxu0
        %v852 = vadd.f32 %v321, %v851
        %v853 = vpop.f32.mrb[0].mxu0
        %854 = vmatprep.mubr.f32.mxu0 0.0
        %855 = vmatmul.mubr.f32.gmra.mrb[0].mxu0 %v487
        %v856 = vpop.f32.mrb[0].mxu0
        %v857 = vadd.f32 %v321, %v856
        %v858 = vpop.f32.mrb[0].mxu0
        %859 = vmatprep.mubr.f32.mxu0 0.0
        %860 = vmatmul.mubr.f32.gmra.mrb[0].mxu0 %v490
        %v861 = vpop.f32.mrb[0].mxu0
        %v862 = vadd.f32 %v321, %v861
        %v863 = vpop.f32.mrb[0].mxu0
        %864 = vmatprep.mubr.f32.mxu0 0.0
        %865 = vmatmul.mubr.f32.gmra.mrb[0].mxu0 %v493
        %v866 = vpop.f32.mrb[0].mxu0
        %v867 = vadd.f32 %v321, %v866
        %v868 = vpop.f32.mrb[0].mxu0
        %869 = vmatprep.mubr.f32.mxu0 0.0
        %870 = vmatmul.mubr.f32.gmra.mrb[0].mxu0 %v496
        %v871 = vpop.f32.mrb[0].mxu0
        %v872 = vadd.f32 %v321, %v871
        %v873 = vpop.f32.mrb[0].mxu0
        %874 = vmatprep.mubr.f32.mxu0 0.0
        %875 = vmatmul.mubr.f32.gmra.mrb[0].mxu0 %v499
        %v876 = vpop.f32.mrb[0].mxu0
        %v877 = vadd.f32 %v321, %v876
        %v878 = vpop.f32.mrb[0].mxu0
        %879 = vmatprep.mubr.f32.mxu0 0.0
        %880 = vmatmul.mubr.f32.gmra.mrb[0].mxu0 %v502
        %v881 = vpop.f32.mrb[0].mxu0
        %v882 = vadd.f32 %v321, %v881
        %v883 = vpop.f32.mrb[0].mxu0
        %884 = vmatprep.mubr.f32.mxu0 0.0
        %885 = vmatmul.mubr.f32.gmra.mrb[0].mxu0 %v505
        %v886 = vpop.f32.mrb[0].mxu0
        %v887 = vadd.f32 %v321, %v886
        %v888 = vpop.f32.mrb[0].mxu0
        %889 = vmatprep.mubr.f32.mxu0 0.0
        %890 = vmatmul.mubr.f32.gmra.mrb[0].mxu0 %v508
        %v891 = vpop.f32.mrb[0].mxu0
        %v892 = vadd.f32 %v321, %v891
        %v893 = vpop.f32.mrb[0].mxu0
        %894 = vmatprep.mubr.f32.mxu0 0.0
        %895 = vmatmul.mubr.f32.gmra.mrb[0].mxu0 %v511
        %v896 = vpop.f32.mrb[0].mxu0
        %v897 = vadd.f32 %v321, %v896
        %v898 = vpop.f32.mrb[0].mxu0
        %899 = vmatprep.mubr.f32.mxu0 0.0
        %900 = vmatmul.mubr.f32.gmra.mrb[0].mxu0 %v514
        %v901 = vpop.f32.mrb[0].mxu0
        %v902 = vadd.f32 %v321, %v901
        %v903 = vpop.f32.mrb[0].mxu0
        %904 = vdwg.mxu0
        %v905 = vtanh.pop %v587
        %v906 = vtanh.pop %v592
        %v907 = vtanh.pop %v597
        %v908 = vtanh.pop %v602
        %v909 = vtanh.pop %v607
        %v910 = vtanh.pop %v612
        %v911 = vtanh.pop %v617
        %v912 = vtanh.pop %v622
        %v913 = vtanh.pop %v627
        %v914 = vtanh.pop %v632
        %v915 = vtanh.pop %v637
        %v916 = vtanh.pop %v642
        %v917 = vtanh.pop %v647
        %v918 = vtanh.pop %v652
        %v919 = vtanh.pop %v657
        %v920 = vtanh.pop %v662
        %v921 = vtanh.pop %v667
        %v922 = vtanh.pop %v672
        %v923 = vtanh.pop %v677
        %v924 = vtanh.pop %v682
        %v925 = vtanh.pop %v687
        %v926 = vtanh.pop %v692
        %v927 = vtanh.pop %v697
        %v928 = vtanh.pop %v702
        %v929 = vtanh.pop %v707
        %v930 = vtanh.pop %v712
        %v931 = vtanh.pop %v717
        %v932 = vtanh.pop %v722
        %v933 = vtanh.pop %v727
        %v934 = vtanh.pop %v732
        %v935 = vtanh.pop %v737
        %v936 = vtanh.pop %v742
        %v937 = vtanh.pop %v747
        %v938 = vtanh.pop %v752
        %v939 = vtanh.pop %v757
        %v940 = vtanh.pop %v762
        %v941 = vtanh.pop %v767
        %v942 = vtanh.pop %v772
        %v943 = vtanh.pop %v777
        %v944 = vtanh.pop %v782
        %v945 = vtanh.pop %v787
        %v946 = vtanh.pop %v792
        %v947 = vtanh.pop %v797
        %v948 = vtanh.pop %v802
        %v949 = vtanh.pop %v807
        %v950 = vtanh.pop %v812
        %v951 = vtanh.pop %v817
        %v952 = vtanh.pop %v822
        %v953 = vtanh.pop %v827
        %v954 = vtanh.pop %v832
        %v955 = vtanh.pop %v837
        %v956 = vtanh.pop %v842
        %v957 = vtanh.pop %v847
        %v958 = vtanh.pop %v852
        %v959 = vtanh.pop %v857
        %v960 = vtanh.pop %v862
        %v961 = vtanh.pop %v867
        %v962 = vtanh.pop %v872
        %v963 = vtanh.pop %v877
        %v964 = vtanh.pop %v882
        %v965 = vtanh.pop %v887
        %v966 = vtanh.pop %v892
        %v967 = vtanh.pop %v897
        %v968 = vtanh.pop %v902
        %v969 = vld [vmem:[%s4] sm:$0xff]
        %v970 = vld [vmem:[%s4 + $0x8] sm:$0xff]
        %v971 = vld [vmem:[%s4 + $0x10] sm:$0xff]
        %v972 = vld [vmem:[%s4 + $0x18] sm:$0xff]
        %v973 = vld [vmem:[%s5] sm:$0x1]
        %v975 = vlaneseq
        %v976 = vshrl.u32 %v975, 7
        %v977 = vsub.s32 0, %v976
        %v978 = vrot.slane %v973, %v977
        %vm980 = vcmask 261120
        %v982 = vsel %vm980, %v905, 0
        %v985 = vsel %vm980, %v906, 0
        %v988 = vsel %vm980, %v907, 0
        %v991 = vsel %vm980, %v908, 0
        %v994 = vsel %vm980, %v909, 0
        %v997 = vsel %vm980, %v910, 0
        %v1000 = vsel %vm980, %v911, 0
        %v1003 = vsel %vm980, %v912, 0
        %v1006 = vsel %vm980, %v913, 0
        %v1009 = vsel %vm980, %v914, 0
        %v1012 = vsel %vm980, %v915, 0
        %v1015 = vsel %vm980, %v916, 0
        %v1018 = vsel %vm980, %v917, 0
        %v1021 = vsel %vm980, %v918, 0
        %v1024 = vsel %vm980, %v919, 0
        %v1027 = vsel %vm980, %v920, 0
        %v1030 = vsel %vm980, %v921, 0
        %v1033 = vsel %vm980, %v922, 0
        %v1036 = vsel %vm980, %v923, 0
        %v1039 = vsel %vm980, %v924, 0
        %v1042 = vsel %vm980, %v925, 0
        %v1045 = vsel %vm980, %v926, 0
        %v1048 = vsel %vm980, %v927, 0
        %v1051 = vsel %vm980, %v928, 0
        %v1054 = vsel %vm980, %v929, 0
        %v1057 = vsel %vm980, %v930, 0
        %v1060 = vsel %vm980, %v931, 0
        %v1063 = vsel %vm980, %v932, 0
        %v1066 = vsel %vm980, %v933, 0
        %v1069 = vsel %vm980, %v934, 0
        %v1072 = vsel %vm980, %v935, 0
        %v1075 = vsel %vm980, %v936, 0
        %v1078 = vsel %vm980, %v937, 0
        %v1081 = vsel %vm980, %v938, 0
        %v1084 = vsel %vm980, %v939, 0
        %v1087 = vsel %vm980, %v940, 0
        %v1090 = vsel %vm980, %v941, 0
        %v1093 = vsel %vm980, %v942, 0
        %v1096 = vsel %vm980, %v943, 0
        %v1099 = vsel %vm980, %v944, 0
        %v1102 = vsel %vm980, %v945, 0
        %v1105 = vsel %vm980, %v946, 0
        %v1108 = vsel %vm980, %v947, 0
        %v1111 = vsel %vm980, %v948, 0
        %v1114 = vsel %vm980, %v949, 0
        %v1117 = vsel %vm980, %v950, 0
        %v1120 = vsel %vm980, %v951, 0
        %v1123 = vsel %vm980, %v952, 0
        %v1126 = vsel %vm980, %v953, 0
        %v1129 = vsel %vm980, %v954, 0
        %v1132 = vsel %vm980, %v955, 0
        %v1135 = vsel %vm980, %v956, 0
        %v1138 = vsel %vm980, %v957, 0
        %v1141 = vsel %vm980, %v958, 0
        %v1144 = vsel %vm980, %v959, 0
        %v1147 = vsel %vm980, %v960, 0
        %v1150 = vsel %vm980, %v961, 0
        %v1153 = vsel %vm980, %v962, 0
        %v1156 = vsel %vm980, %v963, 0
        %v1159 = vsel %vm980, %v964, 0
        %v1162 = vsel %vm980, %v965, 0
        %v1165 = vsel %vm980, %v966, 0
        %v1168 = vsel %vm980, %v967, 0
        %v1171 = vsel %vm980, %v968, 0
        %1173 = vmatprep.subr.mxu0 0.0
        %1174 = vmatpush1.msra.mxu0 %v969
        %1175 = vmatprep.subr.mxu0 0.0
        %1176 = vmatpush1.msra.mxu0 %v970
        %1177 = vmatprep.subr.mxu0 0.0
        %1178 = vmatpush1.msra.mxu0 %v971
        %1179 = vmatprep.subr.mxu0 0.0
        %1180 = vmatpush1.msra.mxu0 %v972
        %1181 = vmatprep.subr.mxu0 0.0
        %1182 = vmatpush1.msra.mxu0 0.0
        %1183 = vmatprep.subr.mxu0 0.0
        %1184 = vmatpush1.msra.mxu0 0.0
        %1185 = vmatprep.subr.mxu0 0.0
        %1186 = vmatpush1.msra.mxu0 0.0
        %1187 = vmatprep.subr.mxu0 0.0
        %1188 = vmatpush1.msra.mxu0 0.0
        %1189 = vmatprep.subr.mxu0 0.0
        %1190 = vmatpush1.msra.mxu0 0.0
        %1191 = vmatprep.subr.mxu0 0.0
        %1192 = vmatpush1.msra.mxu0 0.0
        %1193 = vmatprep.subr.mxu0 0.0
        %1194 = vmatpush1.msra.mxu0 0.0
        %1195 = vmatprep.subr.mxu0 0.0
        %1196 = vmatpush1.msra.mxu0 0.0
        %1197 = vmatprep.subr.mxu0 0.0
        %1198 = vmatpush1.msra.mxu0 0.0
        %1199 = vmatprep.subr.mxu0 0.0
        %1200 = vmatpush1.msra.mxu0 0.0
        %1201 = vmatprep.subr.mxu0 0.0
        %1202 = vmatpush1.msra.mxu0 0.0
        %1203 = vmatprep.subr.mxu0 0.0
        %1204 = vmatpush1.msra.mxu0 0.0
        %1205 = vmatprep.subr.mxu0 0.0
        %1206 = vmatpush1.msra.mxu0 0.0
        %1207 = vmatprep.subr.mxu0 0.0
        %1208 = vmatpush1.msra.mxu0 0.0
        %1209 = vmatprep.subr.mxu0 0.0
        %1210 = vmatpush1.msra.mxu0 0.0
        %1211 = vmatprep.subr.mxu0 0.0
        %1212 = vmatpush1.msra.mxu0 0.0
        %1213 = vmatprep.subr.mxu0 0.0
        %1214 = vmatpush1.msra.mxu0 0.0
        %1215 = vmatprep.subr.mxu0 0.0
        %1216 = vmatpush1.msra.mxu0 0.0
        %1217 = vmatprep.subr.mxu0 0.0
        %1218 = vmatpush1.msra.mxu0 0.0
        %1219 = vmatprep.subr.mxu0 0.0
        %1220 = vmatpush1.msra.mxu0 0.0
        %1221 = vmatprep.subr.mxu0 0.0
        %1222 = vmatpush1.msra.mxu0 0.0
        %1223 = vmatprep.subr.mxu0 0.0
        %1224 = vmatpush1.msra.mxu0 0.0
        %1225 = vmatprep.subr.mxu0 0.0
        %1226 = vmatpush1.msra.mxu0 0.0
        %1227 = vmatprep.subr.mxu0 0.0
        %1228 = vmatpush1.msra.mxu0 0.0
        %1229 = vmatprep.subr.mxu0 0.0
        %1230 = vmatpush1.msra.mxu0 0.0
        %1231 = vmatprep.subr.mxu0 0.0
        %1232 = vmatpush1.msra.mxu0 0.0
        %1233 = vmatprep.subr.mxu0 0.0
        %1234 = vmatpush1.msra.mxu0 0.0
        %1235 = vmatprep.subr.mxu0 0.0
        %1236 = vmatpush1.msra.mxu0 0.0
        %1237 = vmatprep.mubr.f32.mxu0 0.0
        %1238 = vmatmul.mubr.f32.gmra.mrb[0].mxu0 %v982
        %v1239 = vpop.f32.mrb[0].mxu0
        %v1240 = vadd.f32 %v978, %v1239
        %v1241 = vpop.f32.mrb[0].mxu0
        %1242 = vmatprep.mubr.f32.mxu0 0.0
        %1243 = vmatmul.mubr.f32.gmra.mrb[0].mxu0 %v985
        %v1244 = vpop.f32.mrb[0].mxu0
        %v1245 = vadd.f32 %v978, %v1244
        %v1246 = vpop.f32.mrb[0].mxu0
        %1247 = vmatprep.mubr.f32.mxu0 0.0
        %1248 = vmatmul.mubr.f32.gmra.mrb[0].mxu0 %v988
        %v1249 = vpop.f32.mrb[0].mxu0
        %v1250 = vadd.f32 %v978, %v1249
        %v1251 = vpop.f32.mrb[0].mxu0
        %1252 = vmatprep.mubr.f32.mxu0 0.0
        %1253 = vmatmul.mubr.f32.gmra.mrb[0].mxu0 %v991
        %v1254 = vpop.f32.mrb[0].mxu0
        %v1255 = vadd.f32 %v978, %v1254
        %v1256 = vpop.f32.mrb[0].mxu0
        %1257 = vmatprep.mubr.f32.mxu0 0.0
        %1258 = vmatmul.mubr.f32.gmra.mrb[0].mxu0 %v994
        %v1259 = vpop.f32.mrb[0].mxu0
        %v1260 = vadd.f32 %v978, %v1259
        %v1261 = vpop.f32.mrb[0].mxu0
        %1262 = vmatprep.mubr.f32.mxu0 0.0
        %1263 = vmatmul.mubr.f32.gmra.mrb[0].mxu0 %v997
        %v1264 = vpop.f32.mrb[0].mxu0
        %v1265 = vadd.f32 %v978, %v1264
        %v1266 = vpop.f32.mrb[0].mxu0
        %1267 = vmatprep.mubr.f32.mxu0 0.0
        %1268 = vmatmul.mubr.f32.gmra.mrb[0].mxu0 %v1000
        %v1269 = vpop.f32.mrb[0].mxu0
        %v1270 = vadd.f32 %v978, %v1269
        %v1271 = vpop.f32.mrb[0].mxu0
        %1272 = vmatprep.mubr.f32.mxu0 0.0
        %1273 = vmatmul.mubr.f32.gmra.mrb[0].mxu0 %v1003
        %v1274 = vpop.f32.mrb[0].mxu0
        %v1275 = vadd.f32 %v978, %v1274
        %v1276 = vpop.f32.mrb[0].mxu0
        %1277 = vmatprep.mubr.f32.mxu0 0.0
        %1278 = vmatmul.mubr.f32.gmra.mrb[0].mxu0 %v1006
        %v1279 = vpop.f32.mrb[0].mxu0
        %v1280 = vadd.f32 %v978, %v1279
        %v1281 = vpop.f32.mrb[0].mxu0
        %1282 = vmatprep.mubr.f32.mxu0 0.0
        %1283 = vmatmul.mubr.f32.gmra.mrb[0].mxu0 %v1009
        %v1284 = vpop.f32.mrb[0].mxu0
        %v1285 = vadd.f32 %v978, %v1284
        %v1286 = vpop.f32.mrb[0].mxu0
        %1287 = vmatprep.mubr.f32.mxu0 0.0
        %1288 = vmatmul.mubr.f32.gmra.mrb[0].mxu0 %v1012
        %v1289 = vpop.f32.mrb[0].mxu0
        %v1290 = vadd.f32 %v978, %v1289
        %v1291 = vpop.f32.mrb[0].mxu0
        %1292 = vmatprep.mubr.f32.mxu0 0.0
        %1293 = vmatmul.mubr.f32.gmra.mrb[0].mxu0 %v1015
        %v1294 = vpop.f32.mrb[0].mxu0
        %v1295 = vadd.f32 %v978, %v1294
        %v1296 = vpop.f32.mrb[0].mxu0
        %1297 = vmatprep.mubr.f32.mxu0 0.0
        %1298 = vmatmul.mubr.f32.gmra.mrb[0].mxu0 %v1018
        %v1299 = vpop.f32.mrb[0].mxu0
        %v1300 = vadd.f32 %v978, %v1299
        %v1301 = vpop.f32.mrb[0].mxu0
        %1302 = vmatprep.mubr.f32.mxu0 0.0
        %1303 = vmatmul.mubr.f32.gmra.mrb[0].mxu0 %v1021
        %v1304 = vpop.f32.mrb[0].mxu0
        %v1305 = vadd.f32 %v978, %v1304
        %v1306 = vpop.f32.mrb[0].mxu0
        %1307 = vmatprep.mubr.f32.mxu0 0.0
        %1308 = vmatmul.mubr.f32.gmra.mrb[0].mxu0 %v1024
        %v1309 = vpop.f32.mrb[0].mxu0
        %v1310 = vadd.f32 %v978, %v1309
        %v1311 = vpop.f32.mrb[0].mxu0
        %1312 = vmatprep.mubr.f32.mxu0 0.0
        %1313 = vmatmul.mubr.f32.gmra.mrb[0].mxu0 %v1027
        %v1314 = vpop.f32.mrb[0].mxu0
        %v1315 = vadd.f32 %v978, %v1314
        %v1316 = vpop.f32.mrb[0].mxu0
        %1317 = vmatprep.mubr.f32.mxu0 0.0
        %1318 = vmatmul.mubr.f32.gmra.mrb[0].mxu0 %v1030
        %v1319 = vpop.f32.mrb[0].mxu0
        %v1320 = vadd.f32 %v978, %v1319
        %v1321 = vpop.f32.mrb[0].mxu0
        %1322 = vmatprep.mubr.f32.mxu0 0.0
        %1323 = vmatmul.mubr.f32.gmra.mrb[0].mxu0 %v1033
        %v1324 = vpop.f32.mrb[0].mxu0
        %v1325 = vadd.f32 %v978, %v1324
        %v1326 = vpop.f32.mrb[0].mxu0
        %1327 = vmatprep.mubr.f32.mxu0 0.0
        %1328 = vmatmul.mubr.f32.gmra.mrb[0].mxu0 %v1036
        %v1329 = vpop.f32.mrb[0].mxu0
        %v1330 = vadd.f32 %v978, %v1329
        %v1331 = vpop.f32.mrb[0].mxu0
        %1332 = vmatprep.mubr.f32.mxu0 0.0
        %1333 = vmatmul.mubr.f32.gmra.mrb[0].mxu0 %v1039
        %v1334 = vpop.f32.mrb[0].mxu0
        %v1335 = vadd.f32 %v978, %v1334
        %v1336 = vpop.f32.mrb[0].mxu0
        %1337 = vmatprep.mubr.f32.mxu0 0.0
        %1338 = vmatmul.mubr.f32.gmra.mrb[0].mxu0 %v1042
        %v1339 = vpop.f32.mrb[0].mxu0
        %v1340 = vadd.f32 %v978, %v1339
        %v1341 = vpop.f32.mrb[0].mxu0
        %1342 = vmatprep.mubr.f32.mxu0 0.0
        %1343 = vmatmul.mubr.f32.gmra.mrb[0].mxu0 %v1045
        %v1344 = vpop.f32.mrb[0].mxu0
        %v1345 = vadd.f32 %v978, %v1344
        %v1346 = vpop.f32.mrb[0].mxu0
        %1347 = vmatprep.mubr.f32.mxu0 0.0
        %1348 = vmatmul.mubr.f32.gmra.mrb[0].mxu0 %v1048
        %v1349 = vpop.f32.mrb[0].mxu0
        %v1350 = vadd.f32 %v978, %v1349
        %v1351 = vpop.f32.mrb[0].mxu0
        %1352 = vmatprep.mubr.f32.mxu0 0.0
        %1353 = vmatmul.mubr.f32.gmra.mrb[0].mxu0 %v1051
        %v1354 = vpop.f32.mrb[0].mxu0
        %v1355 = vadd.f32 %v978, %v1354
        %v1356 = vpop.f32.mrb[0].mxu0
        %1357 = vmatprep.mubr.f32.mxu0 0.0
        %1358 = vmatmul.mubr.f32.gmra.mrb[0].mxu0 %v1054
        %v1359 = vpop.f32.mrb[0].mxu0
        %v1360 = vadd.f32 %v978, %v1359
        %v1361 = vpop.f32.mrb[0].mxu0
        %1362 = vmatprep.mubr.f32.mxu0 0.0
        %1363 = vmatmul.mubr.f32.gmra.mrb[0].mxu0 %v1057
        %v1364 = vpop.f32.mrb[0].mxu0
        %v1365 = vadd.f32 %v978, %v1364
        %v1366 = vpop.f32.mrb[0].mxu0
        %1367 = vmatprep.mubr.f32.mxu0 0.0
        %1368 = vmatmul.mubr.f32.gmra.mrb[0].mxu0 %v1060
        %v1369 = vpop.f32.mrb[0].mxu0
        %v1370 = vadd.f32 %v978, %v1369
        %v1371 = vpop.f32.mrb[0].mxu0
        %1372 = vmatprep.mubr.f32.mxu0 0.0
        %1373 = vmatmul.mubr.f32.gmra.mrb[0].mxu0 %v1063
        %v1374 = vpop.f32.mrb[0].mxu0
        %v1375 = vadd.f32 %v978, %v1374
        %v1376 = vpop.f32.mrb[0].mxu0
        %1377 = vmatprep.mubr.f32.mxu0 0.0
        %1378 = vmatmul.mubr.f32.gmra.mrb[0].mxu0 %v1066
        %v1379 = vpop.f32.mrb[0].mxu0
        %v1380 = vadd.f32 %v978, %v1379
        %v1381 = vpop.f32.mrb[0].mxu0
        %1382 = vmatprep.mubr.f32.mxu0 0.0
        %1383 = vmatmul.mubr.f32.gmra.mrb[0].mxu0 %v1069
        %v1384 = vpop.f32.mrb[0].mxu0
        %v1385 = vadd.f32 %v978, %v1384
        %v1386 = vpop.f32.mrb[0].mxu0
        %1387 = vmatprep.mubr.f32.mxu0 0.0
        %1388 = vmatmul.mubr.f32.gmra.mrb[0].mxu0 %v1072
        %v1389 = vpop.f32.mrb[0].mxu0
        %v1390 = vadd.f32 %v978, %v1389
        %v1391 = vpop.f32.mrb[0].mxu0
        %1392 = vmatprep.mubr.f32.mxu0 0.0
        %1393 = vmatmul.mubr.f32.gmra.mrb[0].mxu0 %v1075
        %v1394 = vpop.f32.mrb[0].mxu0
        %v1395 = vadd.f32 %v978, %v1394
        %v1396 = vpop.f32.mrb[0].mxu0
        %1397 = vmatprep.mubr.f32.mxu0 0.0
        %1398 = vmatmul.mubr.f32.gmra.mrb[0].mxu0 %v1078
        %v1399 = vpop.f32.mrb[0].mxu0
        %v1400 = vadd.f32 %v978, %v1399
        %v1401 = vpop.f32.mrb[0].mxu0
        %1402 = vmatprep.mubr.f32.mxu0 0.0
        %1403 = vmatmul.mubr.f32.gmra.mrb[0].mxu0 %v1081
        %v1404 = vpop.f32.mrb[0].mxu0
        %v1405 = vadd.f32 %v978, %v1404
        %v1406 = vpop.f32.mrb[0].mxu0
        %1407 = vmatprep.mubr.f32.mxu0 0.0
        %1408 = vmatmul.mubr.f32.gmra.mrb[0].mxu0 %v1084
        %v1409 = vpop.f32.mrb[0].mxu0
        %v1410 = vadd.f32 %v978, %v1409
        %v1411 = vpop.f32.mrb[0].mxu0
        %1412 = vmatprep.mubr.f32.mxu0 0.0
        %1413 = vmatmul.mubr.f32.gmra.mrb[0].mxu0 %v1087
        %v1414 = vpop.f32.mrb[0].mxu0
        %v1415 = vadd.f32 %v978, %v1414
        %v1416 = vpop.f32.mrb[0].mxu0
        %1417 = vmatprep.mubr.f32.mxu0 0.0
        %1418 = vmatmul.mubr.f32.gmra.mrb[0].mxu0 %v1090
        %v1419 = vpop.f32.mrb[0].mxu0
        %v1420 = vadd.f32 %v978, %v1419
        %v1421 = vpop.f32.mrb[0].mxu0
        %1422 = vmatprep.mubr.f32.mxu0 0.0
        %1423 = vmatmul.mubr.f32.gmra.mrb[0].mxu0 %v1093
        %v1424 = vpop.f32.mrb[0].mxu0
        %v1425 = vadd.f32 %v978, %v1424
        %v1426 = vpop.f32.mrb[0].mxu0
        %1427 = vmatprep.mubr.f32.mxu0 0.0
        %1428 = vmatmul.mubr.f32.gmra.mrb[0].mxu0 %v1096
        %v1429 = vpop.f32.mrb[0].mxu0
        %v1430 = vadd.f32 %v978, %v1429
        %v1431 = vpop.f32.mrb[0].mxu0
        %1432 = vmatprep.mubr.f32.mxu0 0.0
        %1433 = vmatmul.mubr.f32.gmra.mrb[0].mxu0 %v1099
        %v1434 = vpop.f32.mrb[0].mxu0
        %v1435 = vadd.f32 %v978, %v1434
        %v1436 = vpop.f32.mrb[0].mxu0
        %1437 = vmatprep.mubr.f32.mxu0 0.0
        %1438 = vmatmul.mubr.f32.gmra.mrb[0].mxu0 %v1102
        %v1439 = vpop.f32.mrb[0].mxu0
        %v1440 = vadd.f32 %v978, %v1439
        %v1441 = vpop.f32.mrb[0].mxu0
        %1442 = vmatprep.mubr.f32.mxu0 0.0
        %1443 = vmatmul.mubr.f32.gmra.mrb[0].mxu0 %v1105
        %v1444 = vpop.f32.mrb[0].mxu0
        %v1445 = vadd.f32 %v978, %v1444
        %v1446 = vpop.f32.mrb[0].mxu0
        %1447 = vmatprep.mubr.f32.mxu0 0.0
        %1448 = vmatmul.mubr.f32.gmra.mrb[0].mxu0 %v1108
        %v1449 = vpop.f32.mrb[0].mxu0
        %v1450 = vadd.f32 %v978, %v1449
        %v1451 = vpop.f32.mrb[0].mxu0
        %1452 = vmatprep.mubr.f32.mxu0 0.0
        %1453 = vmatmul.mubr.f32.gmra.mrb[0].mxu0 %v1111
        %v1454 = vpop.f32.mrb[0].mxu0
        %v1455 = vadd.f32 %v978, %v1454
        %v1456 = vpop.f32.mrb[0].mxu0
        %1457 = vmatprep.mubr.f32.mxu0 0.0
        %1458 = vmatmul.mubr.f32.gmra.mrb[0].mxu0 %v1114
        %v1459 = vpop.f32.mrb[0].mxu0
        %v1460 = vadd.f32 %v978, %v1459
        %v1461 = vpop.f32.mrb[0].mxu0
        %1462 = vmatprep.mubr.f32.mxu0 0.0
        %1463 = vmatmul.mubr.f32.gmra.mrb[0].mxu0 %v1117
        %v1464 = vpop.f32.mrb[0].mxu0
        %v1465 = vadd.f32 %v978, %v1464
        %v1466 = vpop.f32.mrb[0].mxu0
        %1467 = vmatprep.mubr.f32.mxu0 0.0
        %1468 = vmatmul.mubr.f32.gmra.mrb[0].mxu0 %v1120
        %v1469 = vpop.f32.mrb[0].mxu0
        %v1470 = vadd.f32 %v978, %v1469
        %v1471 = vpop.f32.mrb[0].mxu0
        %1472 = vmatprep.mubr.f32.mxu0 0.0
        %1473 = vmatmul.mubr.f32.gmra.mrb[0].mxu0 %v1123
        %v1474 = vpop.f32.mrb[0].mxu0
        %v1475 = vadd.f32 %v978, %v1474
        %v1476 = vpop.f32.mrb[0].mxu0
        %1477 = vmatprep.mubr.f32.mxu0 0.0
        %1478 = vmatmul.mubr.f32.gmra.mrb[0].mxu0 %v1126
        %v1479 = vpop.f32.mrb[0].mxu0
        %v1480 = vadd.f32 %v978, %v1479
        %v1481 = vpop.f32.mrb[0].mxu0
        %1482 = vmatprep.mubr.f32.mxu0 0.0
        %1483 = vmatmul.mubr.f32.gmra.mrb[0].mxu0 %v1129
        %v1484 = vpop.f32.mrb[0].mxu0
        %v1485 = vadd.f32 %v978, %v1484
        %v1486 = vpop.f32.mrb[0].mxu0
        %1487 = vmatprep.mubr.f32.mxu0 0.0
        %1488 = vmatmul.mubr.f32.gmra.mrb[0].mxu0 %v1132
        %v1489 = vpop.f32.mrb[0].mxu0
        %v1490 = vadd.f32 %v978, %v1489
        %v1491 = vpop.f32.mrb[0].mxu0
        %1492 = vmatprep.mubr.f32.mxu0 0.0
        %1493 = vmatmul.mubr.f32.gmra.mrb[0].mxu0 %v1135
        %v1494 = vpop.f32.mrb[0].mxu0
        %v1495 = vadd.f32 %v978, %v1494
        %v1496 = vpop.f32.mrb[0].mxu0
        %1497 = vmatprep.mubr.f32.mxu0 0.0
        %1498 = vmatmul.mubr.f32.gmra.mrb[0].mxu0 %v1138
        %v1499 = vpop.f32.mrb[0].mxu0
        %v1500 = vadd.f32 %v978, %v1499
        %v1501 = vpop.f32.mrb[0].mxu0
        %1502 = vmatprep.mubr.f32.mxu0 0.0
        %1503 = vmatmul.mubr.f32.gmra.mrb[0].mxu0 %v1141
        %v1504 = vpop.f32.mrb[0].mxu0
        %v1505 = vadd.f32 %v978, %v1504
        %v1506 = vpop.f32.mrb[0].mxu0
        %1507 = vmatprep.mubr.f32.mxu0 0.0
        %1508 = vmatmul.mubr.f32.gmra.mrb[0].mxu0 %v1144
        %v1509 = vpop.f32.mrb[0].mxu0
        %v1510 = vadd.f32 %v978, %v1509
        %v1511 = vpop.f32.mrb[0].mxu0
        %1512 = vmatprep.mubr.f32.mxu0 0.0
        %1513 = vmatmul.mubr.f32.gmra.mrb[0].mxu0 %v1147
        %v1514 = vpop.f32.mrb[0].mxu0
        %v1515 = vadd.f32 %v978, %v1514
        %v1516 = vpop.f32.mrb[0].mxu0
        %1517 = vmatprep.mubr.f32.mxu0 0.0
        %1518 = vmatmul.mubr.f32.gmra.mrb[0].mxu0 %v1150
        %v1519 = vpop.f32.mrb[0].mxu0
        %v1520 = vadd.f32 %v978, %v1519
        %v1521 = vpop.f32.mrb[0].mxu0
        %1522 = vmatprep.mubr.f32.mxu0 0.0
        %1523 = vmatmul.mubr.f32.gmra.mrb[0].mxu0 %v1153
        %v1524 = vpop.f32.mrb[0].mxu0
        %v1525 = vadd.f32 %v978, %v1524
        %v1526 = vpop.f32.mrb[0].mxu0
        %1527 = vmatprep.mubr.f32.mxu0 0.0
        %1528 = vmatmul.mubr.f32.gmra.mrb[0].mxu0 %v1156
        %v1529 = vpop.f32.mrb[0].mxu0
        %v1530 = vadd.f32 %v978, %v1529
        %v1531 = vpop.f32.mrb[0].mxu0
        %1532 = vmatprep.mubr.f32.mxu0 0.0
        %1533 = vmatmul.mubr.f32.gmra.mrb[0].mxu0 %v1159
        %v1534 = vpop.f32.mrb[0].mxu0
        %v1535 = vadd.f32 %v978, %v1534
        %v1536 = vpop.f32.mrb[0].mxu0
        %1537 = vmatprep.mubr.f32.mxu0 0.0
        %1538 = vmatmul.mubr.f32.gmra.mrb[0].mxu0 %v1162
        %v1539 = vpop.f32.mrb[0].mxu0
        %v1540 = vadd.f32 %v978, %v1539
        %v1541 = vpop.f32.mrb[0].mxu0
        %1542 = vmatprep.mubr.f32.mxu0 0.0
        %1543 = vmatmul.mubr.f32.gmra.mrb[0].mxu0 %v1165
        %v1544 = vpop.f32.mrb[0].mxu0
        %v1545 = vadd.f32 %v978, %v1544
        %v1546 = vpop.f32.mrb[0].mxu0
        %1547 = vmatprep.mubr.f32.mxu0 0.0
        %1548 = vmatmul.mubr.f32.gmra.mrb[0].mxu0 %v1168
        %v1549 = vpop.f32.mrb[0].mxu0
        %v1550 = vadd.f32 %v978, %v1549
        %v1551 = vpop.f32.mrb[0].mxu0
        %1552 = vmatprep.mubr.f32.mxu0 0.0
        %1553 = vmatmul.mubr.f32.gmra.mrb[0].mxu0 %v1171
        %v1554 = vpop.f32.mrb[0].mxu0
        %v1555 = vadd.f32 %v978, %v1554
        %v1556 = vpop.f32.mrb[0].mxu0
        %1557 = vdwg.mxu0
        %v1558 = vtanh.pop %v1240
        %v1559 = vtanh.pop %v1245
        %v1560 = vtanh.pop %v1250
        %v1561 = vtanh.pop %v1255
        %v1562 = vtanh.pop %v1260
        %v1563 = vtanh.pop %v1265
        %v1564 = vtanh.pop %v1270
        %v1565 = vtanh.pop %v1275
        %v1566 = vtanh.pop %v1280
        %v1567 = vtanh.pop %v1285
        %v1568 = vtanh.pop %v1290
        %v1569 = vtanh.pop %v1295
        %v1570 = vtanh.pop %v1300
        %v1571 = vtanh.pop %v1305
        %v1572 = vtanh.pop %v1310
        %v1573 = vtanh.pop %v1315
        %v1574 = vtanh.pop %v1320
        %v1575 = vtanh.pop %v1325
        %v1576 = vtanh.pop %v1330
        %v1577 = vtanh.pop %v1335
        %v1578 = vtanh.pop %v1340
        %v1579 = vtanh.pop %v1345
        %v1580 = vtanh.pop %v1350
        %v1581 = vtanh.pop %v1355
        %v1582 = vtanh.pop %v1360
        %v1583 = vtanh.pop %v1365
        %v1584 = vtanh.pop %v1370
        %v1585 = vtanh.pop %v1375
        %v1586 = vtanh.pop %v1380
        %v1587 = vtanh.pop %v1385
        %v1588 = vtanh.pop %v1390
        %v1589 = vtanh.pop %v1395
        %v1590 = vtanh.pop %v1400
        %v1591 = vtanh.pop %v1405
        %v1592 = vtanh.pop %v1410
        %v1593 = vtanh.pop %v1415
        %v1594 = vtanh.pop %v1420
        %v1595 = vtanh.pop %v1425
        %v1596 = vtanh.pop %v1430
        %v1597 = vtanh.pop %v1435
        %v1598 = vtanh.pop %v1440
        %v1599 = vtanh.pop %v1445
        %v1600 = vtanh.pop %v1450
        %v1601 = vtanh.pop %v1455
        %v1602 = vtanh.pop %v1460
        %v1603 = vtanh.pop %v1465
        %v1604 = vtanh.pop %v1470
        %v1605 = vtanh.pop %v1475
        %v1606 = vtanh.pop %v1480
        %v1607 = vtanh.pop %v1485
        %v1608 = vtanh.pop %v1490
        %v1609 = vtanh.pop %v1495
        %v1610 = vtanh.pop %v1500
        %v1611 = vtanh.pop %v1505
        %v1612 = vtanh.pop %v1510
        %v1613 = vtanh.pop %v1515
        %v1614 = vtanh.pop %v1520
        %v1615 = vtanh.pop %v1525
        %v1616 = vtanh.pop %v1530
        %v1617 = vtanh.pop %v1535
        %v1618 = vtanh.pop %v1540
        %v1619 = vtanh.pop %v1545
        %v1620 = vtanh.pop %v1550
        %v1621 = vtanh.pop %v1555
        %v1622 = vld [vmem:[%s1] sm:$0x1]
        %v1624 = vlaneseq
        %v1625 = vshrl.u32 %v1624, 7
        %v1626 = vsub.s32 0, %v1625
        %v1627 = vrot.slane %v1622, %v1626
        %v1629 = vmul.f32 %v1627, %v1558
        %v1630 = vmul.f32 %v1627, %v1559
        %v1631 = vmul.f32 %v1627, %v1560
        %v1632 = vmul.f32 %v1627, %v1561
        %v1633 = vmul.f32 %v1627, %v1562
        %v1634 = vmul.f32 %v1627, %v1563
        %v1635 = vmul.f32 %v1627, %v1564
        %v1636 = vmul.f32 %v1627, %v1565
        %v1637 = vmul.f32 %v1627, %v1566
        %v1638 = vmul.f32 %v1627, %v1567
        %v1639 = vmul.f32 %v1627, %v1568
        %v1640 = vmul.f32 %v1627, %v1569
        %v1641 = vmul.f32 %v1627, %v1570
        %v1642 = vmul.f32 %v1627, %v1571
        %v1643 = vmul.f32 %v1627, %v1572
        %v1644 = vmul.f32 %v1627, %v1573
        %v1645 = vmul.f32 %v1627, %v1574
        %v1646 = vmul.f32 %v1627, %v1575
        %v1647 = vmul.f32 %v1627, %v1576
        %v1648 = vmul.f32 %v1627, %v1577
        %v1649 = vmul.f32 %v1627, %v1578
        %v1650 = vmul.f32 %v1627, %v1579
        %v1651 = vmul.f32 %v1627, %v1580
        %v1652 = vmul.f32 %v1627, %v1581
        %v1653 = vmul.f32 %v1627, %v1582
        %v1654 = vmul.f32 %v1627, %v1583
        %v1655 = vmul.f32 %v1627, %v1584
        %v1656 = vmul.f32 %v1627, %v1585
        %v1657 = vmul.f32 %v1627, %v1586
        %v1658 = vmul.f32 %v1627, %v1587
        %v1659 = vmul.f32 %v1627, %v1588
        %v1660 = vmul.f32 %v1627, %v1589
        %v1661 = vmul.f32 %v1627, %v1590
        %v1662 = vmul.f32 %v1627, %v1591
        %v1663 = vmul.f32 %v1627, %v1592
        %v1664 = vmul.f32 %v1627, %v1593
        %v1665 = vmul.f32 %v1627, %v1594
        %v1666 = vmul.f32 %v1627, %v1595
        %v1667 = vmul.f32 %v1627, %v1596
        %v1668 = vmul.f32 %v1627, %v1597
        %v1669 = vmul.f32 %v1627, %v1598
        %v1670 = vmul.f32 %v1627, %v1599
        %v1671 = vmul.f32 %v1627, %v1600
        %v1672 = vmul.f32 %v1627, %v1601
        %v1673 = vmul.f32 %v1627, %v1602
        %v1674 = vmul.f32 %v1627, %v1603
        %v1675 = vmul.f32 %v1627, %v1604
        %v1676 = vmul.f32 %v1627, %v1605
        %v1677 = vmul.f32 %v1627, %v1606
        %v1678 = vmul.f32 %v1627, %v1607
        %v1679 = vmul.f32 %v1627, %v1608
        %v1680 = vmul.f32 %v1627, %v1609
        %v1681 = vmul.f32 %v1627, %v1610
        %v1682 = vmul.f32 %v1627, %v1611
        %v1683 = vmul.f32 %v1627, %v1612
        %v1684 = vmul.f32 %v1627, %v1613
        %v1685 = vmul.f32 %v1627, %v1614
        %v1686 = vmul.f32 %v1627, %v1615
        %v1687 = vmul.f32 %v1627, %v1616
        %v1688 = vmul.f32 %v1627, %v1617
        %v1689 = vmul.f32 %v1627, %v1618
        %v1690 = vmul.f32 %v1627, %v1619
        %v1691 = vmul.f32 %v1627, %v1620
        %v1692 = vmul.f32 %v1627, %v1621
        %v1693 = vlaneseq
        %v1694 = vshrl.u32 %v1693, 7
        %v1695 = vadd.s32 %v1694, 8
        %v1696 = vadd.s32 %v1694, 16
        %v1697 = vadd.s32 %v1694, 24
        %v1698 = vadd.s32 %v1694, 32
        %v1699 = vadd.s32 %v1694, 40
        %v1700 = vadd.s32 %v1694, 48
        %v1701 = vadd.s32 %v1694, 56
        %v1702 = vadd.s32 %v1694, 64
        %v1703 = vadd.s32 %v1694, 72
        %v1704 = vadd.s32 %v1694, 80
        %v1705 = vadd.s32 %v1694, 88
        %v1706 = vadd.s32 %v1694, 96
        %v1707 = vadd.s32 %v1694, 104
        %v1708 = vadd.s32 %v1694, 112
        %v1709 = vadd.s32 %v1694, 120
        %v1710 = vadd.s32 %v1694, 128
        %v1711 = vadd.s32 %v1694, 136
        %v1712 = vadd.s32 %v1694, 144
        %v1713 = vadd.s32 %v1694, 152
        %v1714 = vadd.s32 %v1694, 160
        %v1715 = vadd.s32 %v1694, 168
        %v1716 = vadd.s32 %v1694, 176
        %v1717 = vadd.s32 %v1694, 184
        %v1718 = vadd.s32 %v1694, 192
        %v1719 = vadd.s32 %v1694, 200
        %v1720 = vadd.s32 %v1694, 208
        %v1721 = vadd.s32 %v1694, 216
        %v1722 = vadd.s32 %v1694, 224
        %v1723 = vadd.s32 %v1694, 232
        %v1724 = vadd.s32 %v1694, 240
        %v1725 = vadd.s32 %v1694, 248
        %v1726 = vadd.s32 %v1694, 256
        %v1727 = vadd.s32 %v1694, 264
        %v1728 = vadd.s32 %v1694, 272
        %v1729 = vadd.s32 %v1694, 280
        %v1730 = vadd.s32 %v1694, 288
        %v1731 = vadd.s32 %v1694, 296
        %v1732 = vadd.s32 %v1694, 304
        %v1733 = vadd.s32 %v1694, 312
        %v1734 = vadd.s32 %v1694, 320
        %v1735 = vadd.s32 %v1694, 328
        %v1736 = vadd.s32 %v1694, 336
        %v1737 = vadd.s32 %v1694, 344
        %v1738 = vadd.s32 %v1694, 352
        %v1739 = vadd.s32 %v1694, 360
        %v1740 = vadd.s32 %v1694, 368
        %v1741 = vadd.s32 %v1694, 376
        %v1742 = vadd.s32 %v1694, 384
        %v1743 = vadd.s32 %v1694, 392
        %v1744 = vadd.s32 %v1694, 400
        %v1745 = vadd.s32 %v1694, 408
        %v1746 = vadd.s32 %v1694, 416
        %v1747 = vadd.s32 %v1694, 424
        %v1748 = vadd.s32 %v1694, 432
        %v1749 = vadd.s32 %v1694, 440
        %v1750 = vadd.s32 %v1694, 448
        %v1751 = vadd.s32 %v1694, 456
        %v1752 = vadd.s32 %v1694, 464
        %v1753 = vadd.s32 %v1694, 472
        %v1754 = vadd.s32 %v1694, 480
        %v1755 = vadd.s32 %v1694, 488
        %v1756 = vadd.s32 %v1694, 496
        %v1757 = vadd.s32 %v1694, 504
        %s1758 = smul.u32 %s20, 512
        %v1759 = vstv %s1758
        %v1760 = vadd.s32 %v1694, %v1759
        %v1761 = vadd.s32 %v1695, %v1759
        %v1762 = vadd.s32 %v1696, %v1759
        %v1763 = vadd.s32 %v1697, %v1759
        %v1764 = vadd.s32 %v1698, %v1759
        %v1765 = vadd.s32 %v1699, %v1759
        %v1766 = vadd.s32 %v1700, %v1759
        %v1767 = vadd.s32 %v1701, %v1759
        %v1768 = vadd.s32 %v1702, %v1759
        %v1769 = vadd.s32 %v1703, %v1759
        %v1770 = vadd.s32 %v1704, %v1759
        %v1771 = vadd.s32 %v1705, %v1759
        %v1772 = vadd.s32 %v1706, %v1759
        %v1773 = vadd.s32 %v1707, %v1759
        %v1774 = vadd.s32 %v1708, %v1759
        %v1775 = vadd.s32 %v1709, %v1759
        %v1776 = vadd.s32 %v1710, %v1759
        %v1777 = vadd.s32 %v1711, %v1759
        %v1778 = vadd.s32 %v1712, %v1759
        %v1779 = vadd.s32 %v1713, %v1759
        %v1780 = vadd.s32 %v1714, %v1759
        %v1781 = vadd.s32 %v1715, %v1759
        %v1782 = vadd.s32 %v1716, %v1759
        %v1783 = vadd.s32 %v1717, %v1759
        %v1784 = vadd.s32 %v1718, %v1759
        %v1785 = vadd.s32 %v1719, %v1759
        %v1786 = vadd.s32 %v1720, %v1759
        %v1787 = vadd.s32 %v1721, %v1759
        %v1788 = vadd.s32 %v1722, %v1759
        %v1789 = vadd.s32 %v1723, %v1759
        %v1790 = vadd.s32 %v1724, %v1759
        %v1791 = vadd.s32 %v1725, %v1759
        %v1792 = vadd.s32 %v1726, %v1759
        %v1793 = vadd.s32 %v1727, %v1759
        %v1794 = vadd.s32 %v1728, %v1759
        %v1795 = vadd.s32 %v1729, %v1759
        %v1796 = vadd.s32 %v1730, %v1759
        %v1797 = vadd.s32 %v1731, %v1759
        %v1798 = vadd.s32 %v1732, %v1759
        %v1799 = vadd.s32 %v1733, %v1759
        %v1800 = vadd.s32 %v1734, %v1759
        %v1801 = vadd.s32 %v1735, %v1759
        %v1802 = vadd.s32 %v1736, %v1759
        %v1803 = vadd.s32 %v1737, %v1759
        %v1804 = vadd.s32 %v1738, %v1759
        %v1805 = vadd.s32 %v1739, %v1759
        %v1806 = vadd.s32 %v1740, %v1759
        %v1807 = vadd.s32 %v1741, %v1759
        %v1808 = vadd.s32 %v1742, %v1759
        %v1809 = vadd.s32 %v1743, %v1759
        %v1810 = vadd.s32 %v1744, %v1759
        %v1811 = vadd.s32 %v1745, %v1759
        %v1812 = vadd.s32 %v1746, %v1759
        %v1813 = vadd.s32 %v1747, %v1759
        %v1814 = vadd.s32 %v1748, %v1759
        %v1815 = vadd.s32 %v1749, %v1759
        %v1816 = vadd.s32 %v1750, %v1759
        %v1817 = vadd.s32 %v1751, %v1759
        %v1818 = vadd.s32 %v1752, %v1759
        %v1819 = vadd.s32 %v1753, %v1759
        %v1820 = vadd.s32 %v1754, %v1759
        %v1821 = vadd.s32 %v1755, %v1759
        %v1822 = vadd.s32 %v1756, %v1759
        %v1823 = vadd.s32 %v1757, %v1759
        %vm1824 = vcmp.lt.s32.totalorder %v1760, 600
        %vm1825 = vcmp.lt.s32.totalorder %v1761, 600
        %vm1826 = vcmp.lt.s32.totalorder %v1762, 600
        %vm1827 = vcmp.lt.s32.totalorder %v1763, 600
        %vm1828 = vcmp.lt.s32.totalorder %v1764, 600
        %vm1829 = vcmp.lt.s32.totalorder %v1765, 600
        %vm1830 = vcmp.lt.s32.totalorder %v1766, 600
        %vm1831 = vcmp.lt.s32.totalorder %v1767, 600
        %vm1832 = vcmp.lt.s32.totalorder %v1768, 600
        %vm1833 = vcmp.lt.s32.totalorder %v1769, 600
        %vm1834 = vcmp.lt.s32.totalorder %v1770, 600
        %vm1835 = vcmp.lt.s32.totalorder %v1771, 600
        %vm1836 = vcmp.lt.s32.totalorder %v1772, 600
        %vm1837 = vcmp.lt.s32.totalorder %v1773, 600
        %vm1838 = vcmp.lt.s32.totalorder %v1774, 600
        %vm1839 = vcmp.lt.s32.totalorder %v1775, 600
        %vm1840 = vcmp.lt.s32.totalorder %v1776, 600
        %vm1841 = vcmp.lt.s32.totalorder %v1777, 600
        %vm1842 = vcmp.lt.s32.totalorder %v1778, 600
        %vm1843 = vcmp.lt.s32.totalorder %v1779, 600
        %vm1844 = vcmp.lt.s32.totalorder %v1780, 600
        %vm1845 = vcmp.lt.s32.totalorder %v1781, 600
        %vm1846 = vcmp.lt.s32.totalorder %v1782, 600
        %vm1847 = vcmp.lt.s32.totalorder %v1783, 600
        %vm1848 = vcmp.lt.s32.totalorder %v1784, 600
        %vm1849 = vcmp.lt.s32.totalorder %v1785, 600
        %vm1850 = vcmp.lt.s32.totalorder %v1786, 600
        %vm1851 = vcmp.lt.s32.totalorder %v1787, 600
        %vm1852 = vcmp.lt.s32.totalorder %v1788, 600
        %vm1853 = vcmp.lt.s32.totalorder %v1789, 600
        %vm1854 = vcmp.lt.s32.totalorder %v1790, 600
        %vm1855 = vcmp.lt.s32.totalorder %v1791, 600
        %vm1856 = vcmp.lt.s32.totalorder %v1792, 600
        %vm1857 = vcmp.lt.s32.totalorder %v1793, 600
        %vm1858 = vcmp.lt.s32.totalorder %v1794, 600
        %vm1859 = vcmp.lt.s32.totalorder %v1795, 600
        %vm1860 = vcmp.lt.s32.totalorder %v1796, 600
        %vm1861 = vcmp.lt.s32.totalorder %v1797, 600
        %vm1862 = vcmp.lt.s32.totalorder %v1798, 600
        %vm1863 = vcmp.lt.s32.totalorder %v1799, 600
        %vm1864 = vcmp.lt.s32.totalorder %v1800, 600
        %vm1865 = vcmp.lt.s32.totalorder %v1801, 600
        %vm1866 = vcmp.lt.s32.totalorder %v1802, 600
        %vm1867 = vcmp.lt.s32.totalorder %v1803, 600
        %vm1868 = vcmp.lt.s32.totalorder %v1804, 600
        %vm1869 = vcmp.lt.s32.totalorder %v1805, 600
        %vm1870 = vcmp.lt.s32.totalorder %v1806, 600
        %vm1871 = vcmp.lt.s32.totalorder %v1807, 600
        %vm1872 = vcmp.lt.s32.totalorder %v1808, 600
        %vm1873 = vcmp.lt.s32.totalorder %v1809, 600
        %vm1874 = vcmp.lt.s32.totalorder %v1810, 600
        %vm1875 = vcmp.lt.s32.totalorder %v1811, 600
        %vm1876 = vcmp.lt.s32.totalorder %v1812, 600
        %vm1877 = vcmp.lt.s32.totalorder %v1813, 600
        %vm1878 = vcmp.lt.s32.totalorder %v1814, 600
        %vm1879 = vcmp.lt.s32.totalorder %v1815, 600
        %vm1880 = vcmp.lt.s32.totalorder %v1816, 600
        %vm1881 = vcmp.lt.s32.totalorder %v1817, 600
        %vm1882 = vcmp.lt.s32.totalorder %v1818, 600
        %vm1883 = vcmp.lt.s32.totalorder %v1819, 600
        %vm1884 = vcmp.lt.s32.totalorder %v1820, 600
        %vm1885 = vcmp.lt.s32.totalorder %v1821, 600
        %vm1886 = vcmp.lt.s32.totalorder %v1822, 600
        %vm1887 = vcmp.lt.s32.totalorder %v1823, 600
        %v1888 = vsel %vm1824, 1, 0
        %v1889 = vsel %vm1825, 1, 0
        %v1890 = vsel %vm1826, 1, 0
        %v1891 = vsel %vm1827, 1, 0
        %v1892 = vsel %vm1828, 1, 0
        %v1893 = vsel %vm1829, 1, 0
        %v1894 = vsel %vm1830, 1, 0
        %v1895 = vsel %vm1831, 1, 0
        %v1896 = vsel %vm1832, 1, 0
        %v1897 = vsel %vm1833, 1, 0
        %v1898 = vsel %vm1834, 1, 0
        %v1899 = vsel %vm1835, 1, 0
        %v1900 = vsel %vm1836, 1, 0
        %v1901 = vsel %vm1837, 1, 0
        %v1902 = vsel %vm1838, 1, 0
        %v1903 = vsel %vm1839, 1, 0
        %v1904 = vsel %vm1840, 1, 0
        %v1905 = vsel %vm1841, 1, 0
        %v1906 = vsel %vm1842, 1, 0
        %v1907 = vsel %vm1843, 1, 0
        %v1908 = vsel %vm1844, 1, 0
        %v1909 = vsel %vm1845, 1, 0
        %v1910 = vsel %vm1846, 1, 0
        %v1911 = vsel %vm1847, 1, 0
        %v1912 = vsel %vm1848, 1, 0
        %v1913 = vsel %vm1849, 1, 0
        %v1914 = vsel %vm1850, 1, 0
        %v1915 = vsel %vm1851, 1, 0
        %v1916 = vsel %vm1852, 1, 0
        %v1917 = vsel %vm1853, 1, 0
        %v1918 = vsel %vm1854, 1, 0
        %v1919 = vsel %vm1855, 1, 0
        %v1920 = vsel %vm1856, 1, 0
        %v1921 = vsel %vm1857, 1, 0
        %v1922 = vsel %vm1858, 1, 0
        %v1923 = vsel %vm1859, 1, 0
        %v1924 = vsel %vm1860, 1, 0
        %v1925 = vsel %vm1861, 1, 0
        %v1926 = vsel %vm1862, 1, 0
        %v1927 = vsel %vm1863, 1, 0
        %v1928 = vsel %vm1864, 1, 0
        %v1929 = vsel %vm1865, 1, 0
        %v1930 = vsel %vm1866, 1, 0
        %v1931 = vsel %vm1867, 1, 0
        %v1932 = vsel %vm1868, 1, 0
        %v1933 = vsel %vm1869, 1, 0
        %v1934 = vsel %vm1870, 1, 0
        %v1935 = vsel %vm1871, 1, 0
        %v1936 = vsel %vm1872, 1, 0
        %v1937 = vsel %vm1873, 1, 0
        %v1938 = vsel %vm1874, 1, 0
        %v1939 = vsel %vm1875, 1, 0
        %v1940 = vsel %vm1876, 1, 0
        %v1941 = vsel %vm1877, 1, 0
        %v1942 = vsel %vm1878, 1, 0
        %v1943 = vsel %vm1879, 1, 0
        %v1944 = vsel %vm1880, 1, 0
        %v1945 = vsel %vm1881, 1, 0
        %v1946 = vsel %vm1882, 1, 0
        %v1947 = vsel %vm1883, 1, 0
        %v1948 = vsel %vm1884, 1, 0
        %v1949 = vsel %vm1885, 1, 0
        %v1950 = vsel %vm1886, 1, 0
        %v1951 = vsel %vm1887, 1, 0
        %vm1952 = vcmp.eq.s32.totalorder %v1888, 1
        %vm1953 = vcmp.eq.s32.totalorder %v1889, 1
        %vm1954 = vcmp.eq.s32.totalorder %v1890, 1
        %vm1955 = vcmp.eq.s32.totalorder %v1891, 1
        %vm1956 = vcmp.eq.s32.totalorder %v1892, 1
        %vm1957 = vcmp.eq.s32.totalorder %v1893, 1
        %vm1958 = vcmp.eq.s32.totalorder %v1894, 1
        %vm1959 = vcmp.eq.s32.totalorder %v1895, 1
        %vm1960 = vcmp.eq.s32.totalorder %v1896, 1
        %vm1961 = vcmp.eq.s32.totalorder %v1897, 1
        %vm1962 = vcmp.eq.s32.totalorder %v1898, 1
        %vm1963 = vcmp.eq.s32.totalorder %v1899, 1
        %vm1964 = vcmp.eq.s32.totalorder %v1900, 1
        %vm1965 = vcmp.eq.s32.totalorder %v1901, 1
        %vm1966 = vcmp.eq.s32.totalorder %v1902, 1
        %vm1967 = vcmp.eq.s32.totalorder %v1903, 1
        %vm1968 = vcmp.eq.s32.totalorder %v1904, 1
        %vm1969 = vcmp.eq.s32.totalorder %v1905, 1
        %vm1970 = vcmp.eq.s32.totalorder %v1906, 1
        %vm1971 = vcmp.eq.s32.totalorder %v1907, 1
        %vm1972 = vcmp.eq.s32.totalorder %v1908, 1
        %vm1973 = vcmp.eq.s32.totalorder %v1909, 1
        %vm1974 = vcmp.eq.s32.totalorder %v1910, 1
        %vm1975 = vcmp.eq.s32.totalorder %v1911, 1
        %vm1976 = vcmp.eq.s32.totalorder %v1912, 1
        %vm1977 = vcmp.eq.s32.totalorder %v1913, 1
        %vm1978 = vcmp.eq.s32.totalorder %v1914, 1
        %vm1979 = vcmp.eq.s32.totalorder %v1915, 1
        %vm1980 = vcmp.eq.s32.totalorder %v1916, 1
        %vm1981 = vcmp.eq.s32.totalorder %v1917, 1
        %vm1982 = vcmp.eq.s32.totalorder %v1918, 1
        %vm1983 = vcmp.eq.s32.totalorder %v1919, 1
        %vm1984 = vcmp.eq.s32.totalorder %v1920, 1
        %vm1985 = vcmp.eq.s32.totalorder %v1921, 1
        %vm1986 = vcmp.eq.s32.totalorder %v1922, 1
        %vm1987 = vcmp.eq.s32.totalorder %v1923, 1
        %vm1988 = vcmp.eq.s32.totalorder %v1924, 1
        %vm1989 = vcmp.eq.s32.totalorder %v1925, 1
        %vm1990 = vcmp.eq.s32.totalorder %v1926, 1
        %vm1991 = vcmp.eq.s32.totalorder %v1927, 1
        %vm1992 = vcmp.eq.s32.totalorder %v1928, 1
        %vm1993 = vcmp.eq.s32.totalorder %v1929, 1
        %vm1994 = vcmp.eq.s32.totalorder %v1930, 1
        %vm1995 = vcmp.eq.s32.totalorder %v1931, 1
        %vm1996 = vcmp.eq.s32.totalorder %v1932, 1
        %vm1997 = vcmp.eq.s32.totalorder %v1933, 1
        %vm1998 = vcmp.eq.s32.totalorder %v1934, 1
        %vm1999 = vcmp.eq.s32.totalorder %v1935, 1
        %vm2000 = vcmp.eq.s32.totalorder %v1936, 1
        %vm2001 = vcmp.eq.s32.totalorder %v1937, 1
        %vm2002 = vcmp.eq.s32.totalorder %v1938, 1
        %vm2003 = vcmp.eq.s32.totalorder %v1939, 1
        %vm2004 = vcmp.eq.s32.totalorder %v1940, 1
        %vm2005 = vcmp.eq.s32.totalorder %v1941, 1
        %vm2006 = vcmp.eq.s32.totalorder %v1942, 1
        %vm2007 = vcmp.eq.s32.totalorder %v1943, 1
        %vm2008 = vcmp.eq.s32.totalorder %v1944, 1
        %vm2009 = vcmp.eq.s32.totalorder %v1945, 1
        %vm2010 = vcmp.eq.s32.totalorder %v1946, 1
        %vm2011 = vcmp.eq.s32.totalorder %v1947, 1
        %vm2012 = vcmp.eq.s32.totalorder %v1948, 1
        %vm2013 = vcmp.eq.s32.totalorder %v1949, 1
        %vm2014 = vcmp.eq.s32.totalorder %v1950, 1
        %vm2015 = vcmp.eq.s32.totalorder %v1951, 1
        %v2016 = vsel %vm1952, %v1629, 0.0
        %v2017 = vsel %vm1953, %v1630, 0.0
        %v2018 = vsel %vm1954, %v1631, 0.0
        %v2019 = vsel %vm1955, %v1632, 0.0
        %v2020 = vsel %vm1956, %v1633, 0.0
        %v2021 = vsel %vm1957, %v1634, 0.0
        %v2022 = vsel %vm1958, %v1635, 0.0
        %v2023 = vsel %vm1959, %v1636, 0.0
        %v2024 = vsel %vm1960, %v1637, 0.0
        %v2025 = vsel %vm1961, %v1638, 0.0
        %v2026 = vsel %vm1962, %v1639, 0.0
        %v2027 = vsel %vm1963, %v1640, 0.0
        %v2028 = vsel %vm1964, %v1641, 0.0
        %v2029 = vsel %vm1965, %v1642, 0.0
        %v2030 = vsel %vm1966, %v1643, 0.0
        %v2031 = vsel %vm1967, %v1644, 0.0
        %v2032 = vsel %vm1968, %v1645, 0.0
        %v2033 = vsel %vm1969, %v1646, 0.0
        %v2034 = vsel %vm1970, %v1647, 0.0
        %v2035 = vsel %vm1971, %v1648, 0.0
        %v2036 = vsel %vm1972, %v1649, 0.0
        %v2037 = vsel %vm1973, %v1650, 0.0
        %v2038 = vsel %vm1974, %v1651, 0.0
        %v2039 = vsel %vm1975, %v1652, 0.0
        %v2040 = vsel %vm1976, %v1653, 0.0
        %v2041 = vsel %vm1977, %v1654, 0.0
        %v2042 = vsel %vm1978, %v1655, 0.0
        %v2043 = vsel %vm1979, %v1656, 0.0
        %v2044 = vsel %vm1980, %v1657, 0.0
        %v2045 = vsel %vm1981, %v1658, 0.0
        %v2046 = vsel %vm1982, %v1659, 0.0
        %v2047 = vsel %vm1983, %v1660, 0.0
        %v2048 = vsel %vm1984, %v1661, 0.0
        %v2049 = vsel %vm1985, %v1662, 0.0
        %v2050 = vsel %vm1986, %v1663, 0.0
        %v2051 = vsel %vm1987, %v1664, 0.0
        %v2052 = vsel %vm1988, %v1665, 0.0
        %v2053 = vsel %vm1989, %v1666, 0.0
        %v2054 = vsel %vm1990, %v1667, 0.0
        %v2055 = vsel %vm1991, %v1668, 0.0
        %v2056 = vsel %vm1992, %v1669, 0.0
        %v2057 = vsel %vm1993, %v1670, 0.0
        %v2058 = vsel %vm1994, %v1671, 0.0
        %v2059 = vsel %vm1995, %v1672, 0.0
        %v2060 = vsel %vm1996, %v1673, 0.0
        %v2061 = vsel %vm1997, %v1674, 0.0
        %v2062 = vsel %vm1998, %v1675, 0.0
        %v2063 = vsel %vm1999, %v1676, 0.0
        %v2064 = vsel %vm2000, %v1677, 0.0
        %v2065 = vsel %vm2001, %v1678, 0.0
        %v2066 = vsel %vm2002, %v1679, 0.0
        %v2067 = vsel %vm2003, %v1680, 0.0
        %v2068 = vsel %vm2004, %v1681, 0.0
        %v2069 = vsel %vm2005, %v1682, 0.0
        %v2070 = vsel %vm2006, %v1683, 0.0
        %v2071 = vsel %vm2007, %v1684, 0.0
        %v2072 = vsel %vm2008, %v1685, 0.0
        %v2073 = vsel %vm2009, %v1686, 0.0
        %v2074 = vsel %vm2010, %v1687, 0.0
        %v2075 = vsel %vm2011, %v1688, 0.0
        %v2076 = vsel %vm2012, %v1689, 0.0
        %v2077 = vsel %vm2013, %v1690, 0.0
        %v2078 = vsel %vm2014, %v1691, 0.0
        %v2079 = vsel %vm2015, %v1692, 0.0
        %v2080 = vsel %vm980, %v2016, 0.0
        %v2081 = vsel %vm980, %v2017, 0.0
        %v2082 = vadd.f32 %v2080, %v2081
        %v2083 = vsel %vm980, %v2018, 0.0
        %v2084 = vadd.f32 %v2082, %v2083
        %v2085 = vsel %vm980, %v2019, 0.0
        %v2086 = vadd.f32 %v2084, %v2085
        %v2087 = vsel %vm980, %v2020, 0.0
        %v2088 = vadd.f32 %v2086, %v2087
        %v2089 = vsel %vm980, %v2021, 0.0
        %v2090 = vadd.f32 %v2088, %v2089
        %v2091 = vsel %vm980, %v2022, 0.0
        %v2092 = vadd.f32 %v2090, %v2091
        %v2093 = vsel %vm980, %v2023, 0.0
        %v2094 = vadd.f32 %v2092, %v2093
        %v2095 = vsel %vm980, %v2024, 0.0
        %v2096 = vadd.f32 %v2094, %v2095
        %v2097 = vsel %vm980, %v2025, 0.0
        %v2098 = vadd.f32 %v2096, %v2097
        %v2099 = vsel %vm980, %v2026, 0.0
        %v2100 = vadd.f32 %v2098, %v2099
        %v2101 = vsel %vm980, %v2027, 0.0
        %v2102 = vadd.f32 %v2100, %v2101
        %v2103 = vsel %vm980, %v2028, 0.0
        %v2104 = vadd.f32 %v2102, %v2103
        %v2105 = vsel %vm980, %v2029, 0.0
        %v2106 = vadd.f32 %v2104, %v2105
        %v2107 = vsel %vm980, %v2030, 0.0
        %v2108 = vadd.f32 %v2106, %v2107
        %v2109 = vsel %vm980, %v2031, 0.0
        %v2110 = vadd.f32 %v2108, %v2109
        %v2111 = vsel %vm980, %v2032, 0.0
        %v2112 = vadd.f32 %v2110, %v2111
        %v2113 = vsel %vm980, %v2033, 0.0
        %v2114 = vadd.f32 %v2112, %v2113
        %v2115 = vsel %vm980, %v2034, 0.0
        %v2116 = vadd.f32 %v2114, %v2115
        %v2117 = vsel %vm980, %v2035, 0.0
        %v2118 = vadd.f32 %v2116, %v2117
        %v2119 = vsel %vm980, %v2036, 0.0
        %v2120 = vadd.f32 %v2118, %v2119
        %v2121 = vsel %vm980, %v2037, 0.0
        %v2122 = vadd.f32 %v2120, %v2121
        %v2123 = vsel %vm980, %v2038, 0.0
        %v2124 = vadd.f32 %v2122, %v2123
        %v2125 = vsel %vm980, %v2039, 0.0
        %v2126 = vadd.f32 %v2124, %v2125
        %v2127 = vsel %vm980, %v2040, 0.0
        %v2128 = vadd.f32 %v2126, %v2127
        %v2129 = vsel %vm980, %v2041, 0.0
        %v2130 = vadd.f32 %v2128, %v2129
        %v2131 = vsel %vm980, %v2042, 0.0
        %v2132 = vadd.f32 %v2130, %v2131
        %v2133 = vsel %vm980, %v2043, 0.0
        %v2134 = vadd.f32 %v2132, %v2133
        %v2135 = vsel %vm980, %v2044, 0.0
        %v2136 = vadd.f32 %v2134, %v2135
        %v2137 = vsel %vm980, %v2045, 0.0
        %v2138 = vadd.f32 %v2136, %v2137
        %v2139 = vsel %vm980, %v2046, 0.0
        %v2140 = vadd.f32 %v2138, %v2139
        %v2141 = vsel %vm980, %v2047, 0.0
        %v2142 = vadd.f32 %v2140, %v2141
        %v2143 = vsel %vm980, %v2048, 0.0
        %v2144 = vadd.f32 %v2142, %v2143
        %v2145 = vsel %vm980, %v2049, 0.0
        %v2146 = vadd.f32 %v2144, %v2145
        %v2147 = vsel %vm980, %v2050, 0.0
        %v2148 = vadd.f32 %v2146, %v2147
        %v2149 = vsel %vm980, %v2051, 0.0
        %v2150 = vadd.f32 %v2148, %v2149
        %v2151 = vsel %vm980, %v2052, 0.0
        %v2152 = vadd.f32 %v2150, %v2151
        %v2153 = vsel %vm980, %v2053, 0.0
        %v2154 = vadd.f32 %v2152, %v2153
        %v2155 = vsel %vm980, %v2054, 0.0
        %v2156 = vadd.f32 %v2154, %v2155
        %v2157 = vsel %vm980, %v2055, 0.0
        %v2158 = vadd.f32 %v2156, %v2157
        %v2159 = vsel %vm980, %v2056, 0.0
        %v2160 = vadd.f32 %v2158, %v2159
        %v2161 = vsel %vm980, %v2057, 0.0
        %v2162 = vadd.f32 %v2160, %v2161
        %v2163 = vsel %vm980, %v2058, 0.0
        %v2164 = vadd.f32 %v2162, %v2163
        %v2165 = vsel %vm980, %v2059, 0.0
        %v2166 = vadd.f32 %v2164, %v2165
        %v2167 = vsel %vm980, %v2060, 0.0
        %v2168 = vadd.f32 %v2166, %v2167
        %v2169 = vsel %vm980, %v2061, 0.0
        %v2170 = vadd.f32 %v2168, %v2169
        %v2171 = vsel %vm980, %v2062, 0.0
        %v2172 = vadd.f32 %v2170, %v2171
        %v2173 = vsel %vm980, %v2063, 0.0
        %v2174 = vadd.f32 %v2172, %v2173
        %v2175 = vsel %vm980, %v2064, 0.0
        %v2176 = vadd.f32 %v2174, %v2175
        %v2177 = vsel %vm980, %v2065, 0.0
        %v2178 = vadd.f32 %v2176, %v2177
        %v2179 = vsel %vm980, %v2066, 0.0
        %v2180 = vadd.f32 %v2178, %v2179
        %v2181 = vsel %vm980, %v2067, 0.0
        %v2182 = vadd.f32 %v2180, %v2181
        %v2183 = vsel %vm980, %v2068, 0.0
        %v2184 = vadd.f32 %v2182, %v2183
        %v2185 = vsel %vm980, %v2069, 0.0
        %v2186 = vadd.f32 %v2184, %v2185
        %v2187 = vsel %vm980, %v2070, 0.0
        %v2188 = vadd.f32 %v2186, %v2187
        %v2189 = vsel %vm980, %v2071, 0.0
        %v2190 = vadd.f32 %v2188, %v2189
        %v2191 = vsel %vm980, %v2072, 0.0
        %v2192 = vadd.f32 %v2190, %v2191
        %v2193 = vsel %vm980, %v2073, 0.0
        %v2194 = vadd.f32 %v2192, %v2193
        %v2195 = vsel %vm980, %v2074, 0.0
        %v2196 = vadd.f32 %v2194, %v2195
        %v2197 = vsel %vm980, %v2075, 0.0
        %v2198 = vadd.f32 %v2196, %v2197
        %v2199 = vsel %vm980, %v2076, 0.0
        %v2200 = vadd.f32 %v2198, %v2199
        %v2201 = vsel %vm980, %v2077, 0.0
        %v2202 = vadd.f32 %v2200, %v2201
        %v2203 = vsel %vm980, %v2078, 0.0
        %v2204 = vadd.f32 %v2202, %v2203
        %v2205 = vsel %vm980, %v2079, 0.0
        %v2206 = vadd.f32 %v2204, %v2205
        %v2207 = vrot.slane %v2206, 4
        %v2208 = vadd.f32 %v2206, %v2207
        %v2209 = vrot.slane %v2208, 2
        %v2210 = vadd.f32 %v2208, %v2209
        %v2211 = vrot.slane %v2210, 1
        %v2212 = vadd.f32 %v2210, %v2211
        %vm2213 = vcmask 253952
        %2214 = vst.msk [vmem:[%s244] sm:$0x1] %vm2213, %v2212
        %s2215 = sand.u32 %s159, 1
        %s2216 = scalar_lea.sflag [#allocation3], %s2215
        %s2217 = sand.u32 %s159, 1
        %s2218 = scalar_lea.vmem [#allocation2], %s2217
        // Predicated region
        $region45: #{tpu_custom_call.1} parent=43 // pred_check
          %p2219 = pneg %p169
        $region46: #{tpu_custom_call.1} parent=43 // pred_check_branch
          %2221 = sbr.rel (%p2219) target = $region48
        $region47: #{tpu_custom_call.1} parent=43 // pred_region
          %s2223 = ssub.s32 16, 16
          %2224 = vsyncadd %s2216, %s2223
          %s2225 = smul.addr %s20, 16
          %s2226 = scalar_lea.hbm %s6, %s2225
          %s2228 = sshll.u32 %s2218, 4
          %s2229 = int_to_ptr.vmem [resolvable:$true] %s2228
          %2231 = dma.vmem_to_hbm [thread:$0]  %s2229, 16, %s2226, %s2216
        $region48: #{tpu_custom_call.1} parent=43 // pred_fallthru
          _
      $region44: #{tpu_custom_call.1} parent=5 // pred_fallthru
        _
      %p2232 = scmp.le.s32.totalorder 2, %s15
      // Predicated region
      $region49: #{tpu_custom_call.1} parent=5 // pred_check
        %p2233 = pneg %p2232
      $region50: #{tpu_custom_call.1} parent=5 // pred_check_branch
        %2235 = sbr.rel (%p2233) target = $region52
      $region51: #{tpu_custom_call.1} parent=5 // pred_region
        %s2236 = ssub.s32 %s15, 2
        // Predicated region
        $region53: #{tpu_custom_call.1} parent=51 // pred_check
          %p2237 = pneg %p175
        $region54: #{tpu_custom_call.1} parent=51 // pred_check_branch
          %2239 = sbr.rel (%p2237) target = $region56
        $region55: #{tpu_custom_call.1} parent=51 // pred_region
          %s2240 = sand.u32 %s160, 1
          %s2241 = scalar_lea.sflag [#allocation3], %s2240
          %s2242 = sand.u32 %s160, 1
          %s2243 = scalar_lea.vmem [#allocation2], %s2242
          %2244 = dma.done %s2241, 16
        $region56: #{tpu_custom_call.1} parent=51 // pred_fallthru
          _
      $region52: #{tpu_custom_call.1} parent=5 // pred_fallthru
        _
    $region6: #{tpu_custom_call.1} parent=1 // loop_footer
      %s19 = sadd.s32 1, %s15
    $region7: #{tpu_custom_call.1} parent=1 // loop_footer_branch
      %14 = sbr.rel target = $region3
    $region8: #{tpu_custom_call.1} parent=1 // loop_exit
      _
    %2245 = vsyncpa [#allocation3], 1
    %s2246 = scalar_lea.sflag [#allocation3], 1
    %2247 = vsyncpa %s2246, 1

</llo_original>
